<compile_context>
chip_gen: v6e
topology: v6e:2x2x1
jax: 0.10.0
libtpu: 0.0.40
codegen_flags: <defaults>
</compile_context>

<pallas_src>
import jax
import jax.numpy as jnp
from jax.experimental import pallas as pl
from jax.experimental.pallas import tpu as pltpu


def _round_up(x, m):
    return (x + m - 1) // m * m


def _cdiv(a, b):
    return -(-a // b)


def _mlp_kernel(x_ref, w1_ref, w2_ref, w3_ref, w4_ref, w5_ref, b_ref, o_ref):
    """Fused 5-layer MLP: relu(x@W1+b1) -> ... -> relu(h@W5+b5).

    b_ref holds the 5 biases packed row-wise into a single f32 (8, H_pad) tile.
    """
    w_refs = (w1_ref, w2_ref, w3_ref, w4_ref, w5_ref)
    h = x_ref[...]                      # compute dtype (bf16 stays bf16)
    compute_dtype = h.dtype
    for row, w_ref in enumerate(w_refs):
        y = jnp.dot(h, w_ref[...], preferred_element_type=jnp.float32)
        y = jnp.maximum(y + b_ref[pl.ds(row, 1), :], 0.0)   # f32 bias + ReLU
        if row + 1 < len(w_refs):
            # Keep the MXU LHS in the low-precision compute dtype for the next
            # layer (4/5 of the FLOPs); accumulation stays f32 via
            # preferred_element_type.
            h = y.astype(compute_dtype)
        else:
            h = y                        # final layer: store from f32 accum
    o_ref[...] = h.astype(o_ref.dtype)


def multi_fitting_layer(x, params, *, tile_m=None, compute_dtype=None):
    """x: [B, input_size]; params: list of 5 (W[in, out], b[out]) tuples."""
    B, f_in = x.shape
    assert len(params) == 5
    hidden = params[0][0].shape[1]
    out_dtype = x.dtype
    if compute_dtype is None:
        compute_dtype = x.dtype
    compute_dtype = jnp.dtype(compute_dtype)

    # Lane-pad feature dims to 128 so every matmul uses full MXU columns and
    # the output store is an unmasked, lane-dense vst.  Zero padding is exact
    # (zero W rows/cols, zero bias, ReLU(0)=0); padded batch rows are sliced
    # off before returning.
    f_pad = _round_up(f_in, 128)
    h_pad = _round_up(hidden, 128)

    # --- batch tiling: balanced tiles; >=2 grid steps for large B (v7x). ---
    if tile_m is None:
        n_tiles = max(1, _cdiv(B, 512))
        if B > 128:
            n_tiles = max(n_tiles, 2)         # let both v7x TensorCores work
        tile_m = _cdiv(B, n_tiles)
        tile_m = _round_up(tile_m, 128 if tile_m >= 128 else 8)
    else:
        tile_m = _round_up(max(int(tile_m), 8), 8)
    n_tiles = _cdiv(B, tile_m)
    b_pad = n_tiles * tile_m

    # --- pad + cast operands (skip the extra HBM pass if already aligned). ---
    if (b_pad, f_pad) == (B, f_in) and x.dtype == compute_dtype:
        x_p = x
    else:
        x_p = (jnp.zeros((b_pad, f_pad), compute_dtype)
               .at[:B, :f_in].set(x.astype(compute_dtype)))

    ws = []
    for li, (w, _) in enumerate(params):
        in_d, in_p = (f_in, f_pad) if li == 0 else (hidden, h_pad)
        w_p = (jnp.zeros((in_p, h_pad), compute_dtype)
               .at[:in_d, :hidden].set(w.astype(compute_dtype)))
        ws.append(w_p)

    # Pack the 5 biases (kept f32) into one (8, h_pad) tile; rows 0..4 used.
    b_pack = jnp.zeros((8, h_pad), jnp.float32)
    for li, (_, b) in enumerate(params):
        b_pack = b_pack.at[li, :hidden].set(b.astype(jnp.float32).reshape(-1))

    c_bytes = compute_dtype.itemsize
    o_bytes = jnp.dtype(out_dtype).itemsize
    weight_elems = (f_pad + 4 * h_pad) * h_pad

    cost = pl.CostEstimate(
        flops=int(2 * b_pad * h_pad * (f_pad + 4 * h_pad)),
        transcendentals=0,
        bytes_accessed=int(b_pad * f_pad * c_bytes
                           + weight_elems * c_bytes
                           + 8 * h_pad * 4
                           + b_pad * h_pad * o_bytes),
    )

    def build_call(single_buffer_weights):
        # Weights/biases have a constant block index across the grid; with
        # Buffered(1) they are single-buffered (half the resident VMEM).
        resident = ({"pipeline_mode": pl.Buffered(1)}
                    if single_buffer_weights else {})
        w_bufs = 1 if single_buffer_weights else 2

        in_specs = [pl.BlockSpec((tile_m, f_pad), lambda i: (i, 0))]
        in_specs += [pl.BlockSpec(w.shape, lambda i: (0, 0), **resident)
                     for w in ws]
        in_specs += [pl.BlockSpec((8, h_pad), lambda i: (0, 0), **resident)]
        out_spec = pl.BlockSpec((tile_m, h_pad), lambda i: (i, 0))

        # Explicit scoped-VMEM budget from the actual buffers (+4 MiB headroom),
        # clamped to 64 MiB so it is valid on v5e/v6e and v7x alike.
        vmem_bytes = (
            2 * tile_m * f_pad * c_bytes        # double-buffered x tiles
            + 2 * tile_m * h_pad * o_bytes      # double-buffered out tiles
            + w_bufs * weight_elems * c_bytes   # resident weights
            + w_bufs * 8 * h_pad * 4            # packed biases
            + 2 * tile_m * h_pad * 4            # in-kernel f32 intermediates
        )
        vmem_limit = int(min(max(vmem_bytes + (4 << 20), 16 << 20), 64 << 20))

        return pl.pallas_call(
            _mlp_kernel,
            out_shape=jax.ShapeDtypeStruct((b_pad, h_pad), out_dtype),
            grid_spec=pltpu.PrefetchScalarGridSpec(
                num_scalar_prefetch=0,
                grid=(n_tiles,),
                in_specs=in_specs,
                out_specs=out_spec,
            ),
            compiler_params=pltpu.CompilerParams(
                dimension_semantics=("parallel",),
                vmem_limit_bytes=vmem_limit,
            ),
            cost_estimate=cost,
        )

    try:
        out = build_call(True)(x_p, *ws, b_pack)
    except Exception:
        # Fallback for jax versions where Buffered(1) single-buffering on a
        # pallas_call BlockSpec is not supported.
        out = build_call(False)(x_p, *ws, b_pack)

    # NOTE: returning the padded (b_pad, h_pad) slab would save one HBM pass;
    # callers able to consume the padded layout can slice lazily downstream.
    return out[:B, :hidden]


def init_params(key, input_size, hidden_size):
    """Deterministic init mimicking PyTorch Linear default U(-1/sqrt(fan_in), +).

    Weights are stored as [in, out] (transposed vs. torch's [out, in])."""
    sizes = [(input_size, hidden_size)] + [(hidden_size, hidden_size)] * 4
    params = []
    for (fan_in, fan_out) in sizes:
        key, kw, kb = jax.random.split(key, 3)
        bound = 1.0 / jnp.sqrt(fan_in)
        w = jax.random.uniform(kw, (fan_in, fan_out), jnp.float32, -bound, bound)
        b = jax.random.uniform(kb, (fan_out,), jnp.float32, -bound, bound)
        params.append((w, b))
    return params


def reference_mlp(x, params):
    h = x
    for (w, b) in params:
        h = jnp.maximum(h @ w + b, 0.0)
    return h


if __name__ == "__main__":
    # output_size is unused by the PyTorch forward (the Sequential ends at hidden).
    batch_size, input_size, hidden_size, output_size = 16, 32, 32, 32

    key = jax.random.PRNGKey(0)
    key, kx = jax.random.split(key)
    x = jax.random.normal(kx, (batch_size, input_size), jnp.float32)
    params = init_params(key, input_size, hidden_size)

    ref = reference_mlp(x, params)

    # f32 path: whole batch = one block.
    out = jax.block_until_ready(multi_fitting_layer(x, params))
    assert out.shape == (batch_size, hidden_size)
    assert jnp.allclose(out, ref, atol=1e-5, rtol=1e-5), "f32 mismatch vs reference"

    # Multi-step grid (exercises the single-buffered resident weights across steps).
    out_tiled = jax.block_until_ready(multi_fitting_layer(x, params, tile_m=8))
    assert jnp.allclose(out_tiled, ref, atol=1e-5, rtol=1e-5), "tiled mismatch vs reference"

    # bf16 compute path (native MXU mode on v5e/v6e/v7x); loose tolerance.
    out_bf16 = jax.block_until_ready(
        multi_fitting_layer(x, params, compute_dtype=jnp.bfloat16))
    assert jnp.allclose(out_bf16.astype(jnp.float32), ref, atol=1e-1, rtol=1e-1), \
        "bf16 mismatch vs reference"

    print("KERNEL_OK")
</pallas_src>

<mosaic_0001>
module attributes {stable_mosaic.version = 11 : i64} {
  func.func @_mlp_kernel(%arg0: i32, %arg1: memref<16x128xf32, #tpu.memory_space<vmem>>, %arg2: memref<128x128xf32, #tpu.memory_space<vmem>>, %arg3: memref<128x128xf32, #tpu.memory_space<vmem>>, %arg4: memref<128x128xf32, #tpu.memory_space<vmem>>, %arg5: memref<128x128xf32, #tpu.memory_space<vmem>>, %arg6: memref<128x128xf32, #tpu.memory_space<vmem>>, %arg7: memref<8x128xf32, #tpu.memory_space<vmem>>, %arg8: memref<16x128xf32, #tpu.memory_space<vmem>>) attributes {dimension_semantics = [#tpu.dimension_semantics<parallel>], iteration_bounds = array<i64: 1>, scalar_prefetch = 0 : i64, scratch_operands = 0 : i64, tpu.core_type = #tpu.core_type<tc>, window_params = [{transform_indices = @transform_0, window_bounds = array<i64: 16, 128>}, {pipeline_mode = #tpu.pipeline_mode<synchronous>, transform_indices = @transform_1, window_bounds = array<i64: 128, 128>}, {pipeline_mode = #tpu.pipeline_mode<synchronous>, transform_indices = @transform_2, window_bounds = array<i64: 128, 128>}, {pipeline_mode = #tpu.pipeline_mode<synchronous>, transform_indices = @transform_3, window_bounds = array<i64: 128, 128>}, {pipeline_mode = #tpu.pipeline_mode<synchronous>, transform_indices = @transform_4, window_bounds = array<i64: 128, 128>}, {pipeline_mode = #tpu.pipeline_mode<synchronous>, transform_indices = @transform_5, window_bounds = array<i64: 128, 128>}, {pipeline_mode = #tpu.pipeline_mode<synchronous>, transform_indices = @transform_6, window_bounds = array<i64: 8, 128>}, {transform_indices = @transform_7, window_bounds = array<i64: 16, 128>}]} {
    %c0 = arith.constant 0 : index
    %c0_0 = arith.constant 0 : index
    %0 = vector.load %arg1[%c0, %c0_0] : memref<16x128xf32, #tpu.memory_space<vmem>>, vector<16x128xf32>
    %c0_1 = arith.constant 0 : index
    %c0_2 = arith.constant 0 : index
    %1 = vector.load %arg2[%c0_1, %c0_2] : memref<128x128xf32, #tpu.memory_space<vmem>>, vector<128x128xf32>
    %cst = arith.constant dense<0.000000e+00> : vector<16x128xf32>
    %2 = tpu.matmul %0, %1, %cst {dimension_numbers = #tpu.dot_dimension_numbers<[1], [0], [0], [1], [0, 0, 1, 1], [], []>} : vector<16x128xf32>, vector<128x128xf32>, vector<16x128xf32> -> vector<16x128xf32>
    %c0_3 = arith.constant 0 : index
    %c0_4 = arith.constant 0 : index
    %3 = vector.load %arg7[%c0_3, %c0_4] : memref<8x128xf32, #tpu.memory_space<vmem>>, vector<1x128xf32>
    %4 = vector.broadcast %3 : vector<1x128xf32> to vector<16x128xf32>
    %5 = arith.addf %2, %4 : vector<16x128xf32>
    %cst_5 = arith.constant 0.000000e+00 : f32
    %6 = vector.broadcast %cst_5 : f32 to vector<16x128xf32>
    %7 = arith.maximumf %5, %6 : vector<16x128xf32>
    %c0_6 = arith.constant 0 : index
    %c0_7 = arith.constant 0 : index
    %8 = vector.load %arg3[%c0_6, %c0_7] : memref<128x128xf32, #tpu.memory_space<vmem>>, vector<128x128xf32>
    %cst_8 = arith.constant dense<0.000000e+00> : vector<16x128xf32>
    %9 = tpu.matmul %7, %8, %cst_8 {dimension_numbers = #tpu.dot_dimension_numbers<[1], [0], [0], [1], [0, 0, 1, 1], [], []>} : vector<16x128xf32>, vector<128x128xf32>, vector<16x128xf32> -> vector<16x128xf32>
    %c1 = arith.constant 1 : index
    %c0_9 = arith.constant 0 : index
    %10 = vector.load %arg7[%c1, %c0_9] : memref<8x128xf32, #tpu.memory_space<vmem>>, vector<1x128xf32>
    %11 = vector.broadcast %10 : vector<1x128xf32> to vector<16x128xf32>
    %12 = arith.addf %9, %11 : vector<16x128xf32>
    %cst_10 = arith.constant 0.000000e+00 : f32
    %13 = vector.broadcast %cst_10 : f32 to vector<16x128xf32>
    %14 = arith.maximumf %12, %13 : vector<16x128xf32>
    %c0_11 = arith.constant 0 : index
    %c0_12 = arith.constant 0 : index
    %15 = vector.load %arg4[%c0_11, %c0_12] : memref<128x128xf32, #tpu.memory_space<vmem>>, vector<128x128xf32>
    %cst_13 = arith.constant dense<0.000000e+00> : vector<16x128xf32>
    %16 = tpu.matmul %14, %15, %cst_13 {dimension_numbers = #tpu.dot_dimension_numbers<[1], [0], [0], [1], [0, 0, 1, 1], [], []>} : vector<16x128xf32>, vector<128x128xf32>, vector<16x128xf32> -> vector<16x128xf32>
    %c2 = arith.constant 2 : index
    %c0_14 = arith.constant 0 : index
    %17 = vector.load %arg7[%c2, %c0_14] : memref<8x128xf32, #tpu.memory_space<vmem>>, vector<1x128xf32>
    %18 = vector.broadcast %17 : vector<1x128xf32> to vector<16x128xf32>
    %19 = arith.addf %16, %18 : vector<16x128xf32>
    %cst_15 = arith.constant 0.000000e+00 : f32
    %20 = vector.broadcast %cst_15 : f32 to vector<16x128xf32>
    %21 = arith.maximumf %19, %20 : vector<16x128xf32>
    %c0_16 = arith.constant 0 : index
    %c0_17 = arith.constant 0 : index
    %22 = vector.load %arg5[%c0_16, %c0_17] : memref<128x128xf32, #tpu.memory_space<vmem>>, vector<128x128xf32>
    %cst_18 = arith.constant dense<0.000000e+00> : vector<16x128xf32>
    %23 = tpu.matmul %21, %22, %cst_18 {dimension_numbers = #tpu.dot_dimension_numbers<[1], [0], [0], [1], [0, 0, 1, 1], [], []>} : vector<16x128xf32>, vector<128x128xf32>, vector<16x128xf32> -> vector<16x128xf32>
    %c3 = arith.constant 3 : index
    %c0_19 = arith.constant 0 : index
    %24 = vector.load %arg7[%c3, %c0_19] : memref<8x128xf32, #tpu.memory_space<vmem>>, vector<1x128xf32>
    %25 = vector.broadcast %24 : vector<1x128xf32> to vector<16x128xf32>
    %26 = arith.addf %23, %25 : vector<16x128xf32>
    %cst_20 = arith.constant 0.000000e+00 : f32
    %27 = vector.broadcast %cst_20 : f32 to vector<16x128xf32>
    %28 = arith.maximumf %26, %27 : vector<16x128xf32>
    %c0_21 = arith.constant 0 : index
    %c0_22 = arith.constant 0 : index
    %29 = vector.load %arg6[%c0_21, %c0_22] : memref<128x128xf32, #tpu.memory_space<vmem>>, vector<128x128xf32>
    %cst_23 = arith.constant dense<0.000000e+00> : vector<16x128xf32>
    %30 = tpu.matmul %28, %29, %cst_23 {dimension_numbers = #tpu.dot_dimension_numbers<[1], [0], [0], [1], [0, 0, 1, 1], [], []>} : vector<16x128xf32>, vector<128x128xf32>, vector<16x128xf32> -> vector<16x128xf32>
    %c4 = arith.constant 4 : index
    %c0_24 = arith.constant 0 : index
    %31 = vector.load %arg7[%c4, %c0_24] : memref<8x128xf32, #tpu.memory_space<vmem>>, vector<1x128xf32>
    %32 = vector.broadcast %31 : vector<1x128xf32> to vector<16x128xf32>
    %33 = arith.addf %30, %32 : vector<16x128xf32>
    %cst_25 = arith.constant 0.000000e+00 : f32
    %34 = vector.broadcast %cst_25 : f32 to vector<16x128xf32>
    %35 = arith.maximumf %33, %34 : vector<16x128xf32>
    %c0_26 = arith.constant 0 : index
    %c0_27 = arith.constant 0 : index
    %36 = vector.load %arg8[%c0_26, %c0_27] : memref<16x128xf32, #tpu.memory_space<vmem>>, vector<16x128xf32>
    tpu.vector_store %arg8[%c0_26, %c0_27], %35 {strides = array<i32>} : memref<16x128xf32, #tpu.memory_space<vmem>>, vector<16x128xf32>,
    return
  }
  func.func @transform_0(%arg0: i32) -> (i32, i32) {
    %c0_i32 = arith.constant 0 : i32
    %c0_i32_0 = arith.constant 0 : i32
    return %arg0, %c0_i32 : i32, i32
  }
  func.func @transform_1(%arg0: i32) -> (i32, i32) {
    %c0_i32 = arith.constant 0 : i32
    %c0_i32_0 = arith.constant 0 : i32
    %c0_i32_1 = arith.constant 0 : i32
    return %c0_i32, %c0_i32_0 : i32, i32
  }
  func.func @transform_2(%arg0: i32) -> (i32, i32) {
    %c0_i32 = arith.constant 0 : i32
    %c0_i32_0 = arith.constant 0 : i32
    %c0_i32_1 = arith.constant 0 : i32
    return %c0_i32, %c0_i32_0 : i32, i32
  }
  func.func @transform_3(%arg0: i32) -> (i32, i32) {
    %c0_i32 = arith.constant 0 : i32
    %c0_i32_0 = arith.constant 0 : i32
    %c0_i32_1 = arith.constant 0 : i32
    return %c0_i32, %c0_i32_0 : i32, i32
  }
  func.func @transform_4(%arg0: i32) -> (i32, i32) {
    %c0_i32 = arith.constant 0 : i32
    %c0_i32_0 = arith.constant 0 : i32
    %c0_i32_1 = arith.constant 0 : i32
    return %c0_i32, %c0_i32_0 : i32, i32
  }
  func.func @transform_5(%arg0: i32) -> (i32, i32) {
    %c0_i32 = arith.constant 0 : i32
    %c0_i32_0 = arith.constant 0 : i32
    %c0_i32_1 = arith.constant 0 : i32
    return %c0_i32, %c0_i32_0 : i32, i32
  }
  func.func @transform_6(%arg0: i32) -> (i32, i32) {
    %c0_i32 = arith.constant 0 : i32
    %c0_i32_0 = arith.constant 0 : i32
    %c0_i32_1 = arith.constant 0 : i32
    return %c0_i32, %c0_i32_0 : i32, i32
  }
  func.func @transform_7(%arg0: i32) -> (i32, i32) {
    %c0_i32 = arith.constant 0 : i32
    %c0_i32_0 = arith.constant 0 : i32
    return %arg0, %c0_i32 : i32, i32
  }
}

module attributes {stable_mosaic.version = 11 : i64} {
  func.func @_mlp_kernel(%arg0: i32, %arg1: memref<16x128xf32, #tpu.memory_space<vmem>>, %arg2: memref<128x128xf32, #tpu.memory_space<vmem>>, %arg3: memref<128x128xf32, #tpu.memory_space<vmem>>, %arg4: memref<128x128xf32, #tpu.memory_space<vmem>>, %arg5: memref<128x128xf32, #tpu.memory_space<vmem>>, %arg6: memref<128x128xf32, #tpu.memory_space<vmem>>, %arg7: memref<8x128xf32, #tpu.memory_space<vmem>>, %arg8: memref<16x128xf32, #tpu.memory_space<vmem>>) attributes {dimension_semantics = [#tpu.dimension_semantics<parallel>], iteration_bounds = array<i64: 1>, scalar_prefetch = 0 : i64, scratch_operands = 0 : i64, tpu.core_type = #tpu.core_type<tc>, window_params = [{transform_indices = @transform_0, window_bounds = array<i64: 16, 128>}, {pipeline_mode = #tpu.pipeline_mode<synchronous>, transform_indices = @transform_1, window_bounds = array<i64: 128, 128>}, {pipeline_mode = #tpu.pipeline_mode<synchronous>, transform_indices = @transform_2, window_bounds = array<i64: 128, 128>}, {pipeline_mode = #tpu.pipeline_mode<synchronous>, transform_indices = @transform_3, window_bounds = array<i64: 128, 128>}, {pipeline_mode = #tpu.pipeline_mode<synchronous>, transform_indices = @transform_4, window_bounds = array<i64: 128, 128>}, {pipeline_mode = #tpu.pipeline_mode<synchronous>, transform_indices = @transform_5, window_bounds = array<i64: 128, 128>}, {pipeline_mode = #tpu.pipeline_mode<synchronous>, transform_indices = @transform_6, window_bounds = array<i64: 8, 128>}, {transform_indices = @transform_7, window_bounds = array<i64: 16, 128>}]} {
    %c0 = arith.constant 0 : index
    %c0_0 = arith.constant 0 : index
    %0 = vector.load %arg1[%c0, %c0_0] : memref<16x128xf32, #tpu.memory_space<vmem>>, vector<16x128xf32>
    %c0_1 = arith.constant 0 : index
    %c0_2 = arith.constant 0 : index
    %1 = vector.load %arg2[%c0_1, %c0_2] : memref<128x128xf32, #tpu.memory_space<vmem>>, vector<128x128xf32>
    %cst = arith.constant dense<0.000000e+00> : vector<16x128xf32>
    %2 = tpu.matmul %0, %1, %cst {dimension_numbers = #tpu.dot_dimension_numbers<[1], [0], [0], [1], [0, 0, 1, 1], [], []>} : vector<16x128xf32>, vector<128x128xf32>, vector<16x128xf32> -> vector<16x128xf32>
    %c0_3 = arith.constant 0 : index
    %c0_4 = arith.constant 0 : index
    %3 = vector.load %arg7[%c0_3, %c0_4] : memref<8x128xf32, #tpu.memory_space<vmem>>, vector<1x128xf32>
    %4 = vector.broadcast %3 : vector<1x128xf32> to vector<16x128xf32>
    %5 = arith.addf %2, %4 : vector<16x128xf32>
    %cst_5 = arith.constant 0.000000e+00 : f32
    %6 = vector.broadcast %cst_5 : f32 to vector<16x128xf32>
    %7 = arith.maximumf %5, %6 : vector<16x128xf32>
    %c0_6 = arith.constant 0 : index
    %c0_7 = arith.constant 0 : index
    %8 = vector.load %arg3[%c0_6, %c0_7] : memref<128x128xf32, #tpu.memory_space<vmem>>, vector<128x128xf32>
    %cst_8 = arith.constant dense<0.000000e+00> : vector<16x128xf32>
    %9 = tpu.matmul %7, %8, %cst_8 {dimension_numbers = #tpu.dot_dimension_numbers<[1], [0], [0], [1], [0, 0, 1, 1], [], []>} : vector<16x128xf32>, vector<128x128xf32>, vector<16x128xf32> -> vector<16x128xf32>
    %c1 = arith.constant 1 : index
    %c0_9 = arith.constant 0 : index
    %10 = vector.load %arg7[%c1, %c0_9] : memref<8x128xf32, #tpu.memory_space<vmem>>, vector<1x128xf32>
    %11 = vector.broadcast %10 : vector<1x128xf32> to vector<16x128xf32>
    %12 = arith.addf %9, %11 : vector<16x128xf32>
    %cst_10 = arith.constant 0.000000e+00 : f32
    %13 = vector.broadcast %cst_10 : f32 to vector<16x128xf32>
    %14 = arith.maximumf %12, %13 : vector<16x128xf32>
    %c0_11 = arith.constant 0 : index
    %c0_12 = arith.constant 0 : index
    %15 = vector.load %arg4[%c0_11, %c0_12] : memref<128x128xf32, #tpu.memory_space<vmem>>, vector<128x128xf32>
    %cst_13 = arith.constant dense<0.000000e+00> : vector<16x128xf32>
    %16 = tpu.matmul %14, %15, %cst_13 {dimension_numbers = #tpu.dot_dimension_numbers<[1], [0], [0], [1], [0, 0, 1, 1], [], []>} : vector<16x128xf32>, vector<128x128xf32>, vector<16x128xf32> -> vector<16x128xf32>
    %c2 = arith.constant 2 : index
    %c0_14 = arith.constant 0 : index
    %17 = vector.load %arg7[%c2, %c0_14] : memref<8x128xf32, #tpu.memory_space<vmem>>, vector<1x128xf32>
    %18 = vector.broadcast %17 : vector<1x128xf32> to vector<16x128xf32>
    %19 = arith.addf %16, %18 : vector<16x128xf32>
    %cst_15 = arith.constant 0.000000e+00 : f32
    %20 = vector.broadcast %cst_15 : f32 to vector<16x128xf32>
    %21 = arith.maximumf %19, %20 : vector<16x128xf32>
    %c0_16 = arith.constant 0 : index
    %c0_17 = arith.constant 0 : index
    %22 = vector.load %arg5[%c0_16, %c0_17] : memref<128x128xf32, #tpu.memory_space<vmem>>, vector<128x128xf32>
    %cst_18 = arith.constant dense<0.000000e+00> : vector<16x128xf32>
    %23 = tpu.matmul %21, %22, %cst_18 {dimension_numbers = #tpu.dot_dimension_numbers<[1], [0], [0], [1], [0, 0, 1, 1], [], []>} : vector<16x128xf32>, vector<128x128xf32>, vector<16x128xf32> -> vector<16x128xf32>
    %c3 = arith.constant 3 : index
    %c0_19 = arith.constant 0 : index
    %24 = vector.load %arg7[%c3, %c0_19] : memref<8x128xf32, #tpu.memory_space<vmem>>, vector<1x128xf32>
    %25 = vector.broadcast %24 : vector<1x128xf32> to vector<16x128xf32>
    %26 = arith.addf %23, %25 : vector<16x128xf32>
    %cst_20 = arith.constant 0.000000e+00 : f32
    %27 = vector.broadcast %cst_20 : f32 to vector<16x128xf32>
    %28 = arith.maximumf %26, %27 : vector<16x128xf32>
    %c0_21 = arith.constant 0 : index
    %c0_22 = arith.constant 0 : index
    %29 = vector.load %arg6[%c0_21, %c0_22] : memref<128x128xf32, #tpu.memory_space<vmem>>, vector<128x128xf32>
    %cst_23 = arith.constant dense<0.000000e+00> : vector<16x128xf32>
    %30 = tpu.matmul %28, %29, %cst_23 {dimension_numbers = #tpu.dot_dimension_numbers<[1], [0], [0], [1], [0, 0, 1, 1], [], []>} : vector<16x128xf32>, vector<128x128xf32>, vector<16x128xf32> -> vector<16x128xf32>
    %c4 = arith.constant 4 : index
    %c0_24 = arith.constant 0 : index
    %31 = vector.load %arg7[%c4, %c0_24] : memref<8x128xf32, #tpu.memory_space<vmem>>, vector<1x128xf32>
    %32 = vector.broadcast %31 : vector<1x128xf32> to vector<16x128xf32>
    %33 = arith.addf %30, %32 : vector<16x128xf32>
    %cst_25 = arith.constant 0.000000e+00 : f32
    %34 = vector.broadcast %cst_25 : f32 to vector<16x128xf32>
    %35 = arith.maximumf %33, %34 : vector<16x128xf32>
    %c0_26 = arith.constant 0 : index
    %c0_27 = arith.constant 0 : index
    %36 = vector.load %arg8[%c0_26, %c0_27] : memref<16x128xf32, #tpu.memory_space<vmem>>, vector<16x128xf32>
    tpu.vector_store %arg8[%c0_26, %c0_27], %35 {strides = array<i32>} : memref<16x128xf32, #tpu.memory_space<vmem>>, vector<16x128xf32>,
    return
  }
  func.func @transform_0(%arg0: i32) -> (i32, i32) {
    %c0_i32 = arith.constant 0 : i32
    %c0_i32_0 = arith.constant 0 : i32
    return %arg0, %c0_i32 : i32, i32
  }
  func.func @transform_1(%arg0: i32) -> (i32, i32) {
    %c0_i32 = arith.constant 0 : i32
    %c0_i32_0 = arith.constant 0 : i32
    %c0_i32_1 = arith.constant 0 : i32
    return %c0_i32, %c0_i32_0 : i32, i32
  }
  func.func @transform_2(%arg0: i32) -> (i32, i32) {
    %c0_i32 = arith.constant 0 : i32
    %c0_i32_0 = arith.constant 0 : i32
    %c0_i32_1 = arith.constant 0 : i32
    return %c0_i32, %c0_i32_0 : i32, i32
  }
  func.func @transform_3(%arg0: i32) -> (i32, i32) {
    %c0_i32 = arith.constant 0 : i32
    %c0_i32_0 = arith.constant 0 : i32
    %c0_i32_1 = arith.constant 0 : i32
    return %c0_i32, %c0_i32_0 : i32, i32
  }
  func.func @transform_4(%arg0: i32) -> (i32, i32) {
    %c0_i32 = arith.constant 0 : i32
    %c0_i32_0 = arith.constant 0 : i32
    %c0_i32_1 = arith.constant 0 : i32
    return %c0_i32, %c0_i32_0 : i32, i32
  }
  func.func @transform_5(%arg0: i32) -> (i32, i32) {
    %c0_i32 = arith.constant 0 : i32
    %c0_i32_0 = arith.constant 0 : i32
    %c0_i32_1 = arith.constant 0 : i32
    return %c0_i32, %c0_i32_0 : i32, i32
  }
  func.func @transform_6(%arg0: i32) -> (i32, i32) {
    %c0_i32 = arith.constant 0 : i32
    %c0_i32_0 = arith.constant 0 : i32
    %c0_i32_1 = arith.constant 0 : i32
    return %c0_i32, %c0_i32_0 : i32, i32
  }
  func.func @transform_7(%arg0: i32) -> (i32, i32) {
    %c0_i32 = arith.constant 0 : i32
    %c0_i32_0 = arith.constant 0 : i32
    return %arg0, %c0_i32 : i32, i32
  }
}

</mosaic_0001>

<llo_original>
// kernel: tpu_custom_call.1
$region0: #{tpu_custom_call.1}
  #allocation0 [shape = 'u32[]', space=smem, size = 0x4, offset = 0x4, fixed_abs, tag = 'smem constant byte address 0x4 - core index']
  #allocation1 [shape = 'u32[144,128]{1,0:T(1,128)}', space=vmem, size = 0x12000, scoped, tag = 'internal scratch']
  %s0 = inlined_call_operand.hbm [shape: f32[16,128], index: 0, kind: input, shape index: {}]
  %s1 = inlined_call_operand.hbm [shape: f32[128,128], index: 1, kind: input, shape index: {}]
  %s2 = inlined_call_operand.hbm [shape: f32[128,128], index: 2, kind: input, shape index: {}]
  %s3 = inlined_call_operand.hbm [shape: f32[128,128], index: 3, kind: input, shape index: {}]
  %s4 = inlined_call_operand.hbm [shape: f32[128,128], index: 4, kind: input, shape index: {}]
  %s5 = inlined_call_operand.hbm [shape: f32[128,128], index: 5, kind: input, shape index: {}]
  %s6 = inlined_call_operand.vmem [shape: f32[8,128], index: 6, kind: input, shape index: {}]
  %s7 = inlined_call_operand.hbm [shape: f32[16,128], index: 7, kind: output, shape index: {}]
  %s8 = sld [smem:[#allocation0]]
  $region62: #{tpu_custom_call.1} parent=0
    _
  %s10 = ssub.s32 1, %s8
  %s11 = scalar_select 0, %s10, %s8
  $region1: #{tpu_custom_call.1} parent=0
    #allocation2 [shape = 'u8[8192]{0}', space=vmem, size = 0x2000, scoped, tag = 'input window, operand 0, single buffered']
    #allocation3 [shape = 's32[1]{0}', space=sflag, size = 0x4, scoped, tag = 'scoped memory for tpu_custom_call.1']
    #allocation4 [shape = 's32[1]{0}', space=sflag, size = 0x4, scoped, tag = 'scoped memory for tpu_custom_call.1']
    #allocation5 [shape = 'u8[65536]{0}', space=vmem, size = 0x10000, scoped, tag = 'input window, operand 1, single buffered']
    #allocation6 [shape = 's32[1]{0}', space=sflag, size = 0x4, scoped, tag = 'scoped memory for tpu_custom_call.1']
    #allocation7 [shape = 'u8[65536]{0}', space=vmem, size = 0x10000, scoped, tag = 'input window, operand 2, single buffered']
    #allocation8 [shape = 'u8[65536]{0}', space=vmem, size = 0x10000, scoped, tag = 'input window, operand 3, single buffered']
    #allocation9 [shape = 's32[1]{0}', space=sflag, size = 0x4, scoped, tag = 'scoped memory for tpu_custom_call.1']
    #allocation10 [shape = 'u8[65536]{0}', space=vmem, size = 0x10000, scoped, tag = 'input window, operand 4, single buffered']
    #allocation11 [shape = 'u8[65536]{0}', space=vmem, size = 0x10000, scoped, tag = 'input window, operand 5, single buffered']
    #allocation12 [shape = 's32[1]{0}', space=sflag, size = 0x4, scoped, tag = 'scoped memory for tpu_custom_call.1']
    #allocation13 [shape = 'u8[8192]{0}', space=vmem, size = 0x2000, scoped, tag = 'output window, operand 0, single buffered']
    %12 = vsyncpa [#allocation3], 0
    %13 = vsyncpa [#allocation6], 0
    %14 = vsyncpa [#allocation9], 0
    %15 = vsyncpa [#allocation12], 0
    %16 = vsyncpa [#allocation4], 0
    // Predicated region
    $region2: #{tpu_custom_call.1} parent=1 // pred_check
      _
    $region3: #{tpu_custom_call.1} parent=1 // pred_check_branch
      %18 = sbr.rel (0) target = $region5
    $region4: #{tpu_custom_call.1} parent=1 // pred_region
      %s20 = ssub.s32 256, 256
      %21 = vsyncadd [#allocation3], %s20
      %s22 = sshll.u32 [#allocation2], 4
      %s23 = int_to_ptr.vmem [resolvable:$true] %s22
      %28 = dma.hbm_to_vmem [thread:$0]  %s0, 256, %s23, [#allocation3], 128, 128, 8
    $region5: #{tpu_custom_call.1} parent=1 // pred_fallthru
      _
    // Predicated region
    $region6: #{tpu_custom_call.1} parent=1 // pred_check
      _
    $region7: #{tpu_custom_call.1} parent=1 // pred_check_branch
      %30 = sbr.rel (0) target = $region9
    $region8: #{tpu_custom_call.1} parent=1 // pred_region
      %s32 = ssub.s32 2048, 2048
      %33 = vsyncadd [#allocation6], %s32
      %s34 = sshll.u32 [#allocation5], 4
      %s35 = int_to_ptr.vmem [resolvable:$true] %s34
      %40 = dma.hbm_to_vmem [thread:$0]  %s1, 2048, %s35, [#allocation6], 128, 128, 8
    $region9: #{tpu_custom_call.1} parent=1 // pred_fallthru
      _
    // Predicated region
    $region10: #{tpu_custom_call.1} parent=1 // pred_check
      _
    $region11: #{tpu_custom_call.1} parent=1 // pred_check_branch
      %42 = sbr.rel (0) target = $region13
    $region12: #{tpu_custom_call.1} parent=1 // pred_region
      %s44 = ssub.s32 2048, 2048
      %45 = vsyncadd [#allocation6], %s44
      %s46 = sshll.u32 [#allocation7], 4
      %s47 = int_to_ptr.vmem [resolvable:$true] %s46
      %52 = dma.hbm_to_vmem [thread:$0]  %s2, 2048, %s47, [#allocation6], 128, 128, 8
    $region13: #{tpu_custom_call.1} parent=1 // pred_fallthru
      _
    // Predicated region
    $region14: #{tpu_custom_call.1} parent=1 // pred_check
      _
    $region15: #{tpu_custom_call.1} parent=1 // pred_check_branch
      %54 = sbr.rel (0) target = $region17
    $region16: #{tpu_custom_call.1} parent=1 // pred_region
      %s56 = ssub.s32 2048, 2048
      %57 = vsyncadd [#allocation9], %s56
      %s58 = sshll.u32 [#allocation8], 4
      %s59 = int_to_ptr.vmem [resolvable:$true] %s58
      %64 = dma.hbm_to_vmem [thread:$0]  %s3, 2048, %s59, [#allocation9], 128, 128, 8
    $region17: #{tpu_custom_call.1} parent=1 // pred_fallthru
      _
    // Predicated region
    $region18: #{tpu_custom_call.1} parent=1 // pred_check
      _
    $region19: #{tpu_custom_call.1} parent=1 // pred_check_branch
      %66 = sbr.rel (0) target = $region21
    $region20: #{tpu_custom_call.1} parent=1 // pred_region
      %s68 = ssub.s32 2048, 2048
      %69 = vsyncadd [#allocation9], %s68
      %s70 = sshll.u32 [#allocation10], 4
      %s71 = int_to_ptr.vmem [resolvable:$true] %s70
      %76 = dma.hbm_to_vmem [thread:$0]  %s4, 2048, %s71, [#allocation9], 128, 128, 8
    $region21: #{tpu_custom_call.1} parent=1 // pred_fallthru
      _
    // Predicated region
    $region22: #{tpu_custom_call.1} parent=1 // pred_check
      _
    $region23: #{tpu_custom_call.1} parent=1 // pred_check_branch
      %78 = sbr.rel (0) target = $region25
    $region24: #{tpu_custom_call.1} parent=1 // pred_region
      %s80 = ssub.s32 2048, 2048
      %81 = vsyncadd [#allocation12], %s80
      %s82 = sshll.u32 [#allocation11], 4
      %s83 = int_to_ptr.vmem [resolvable:$true] %s82
      %88 = dma.hbm_to_vmem [thread:$0]  %s5, 2048, %s83, [#allocation12], 128, 128, 8
    $region25: #{tpu_custom_call.1} parent=1 // pred_fallthru
      _
    // Predicated region
    $region26: #{tpu_custom_call.1} parent=1 // pred_check
      _
    $region27: #{tpu_custom_call.1} parent=1 // pred_check_branch
      %90 = sbr.rel (0) target = $region29
    $region28: #{tpu_custom_call.1} parent=1 // pred_region
      _
    $region29: #{tpu_custom_call.1} parent=1 // pred_fallthru
      _
    // Predicated region
    $region30: #{tpu_custom_call.1} parent=1 // pred_check
      _
    $region31: #{tpu_custom_call.1} parent=1 // pred_check_branch
      %92 = sbr.rel (0) target = $region33
    $region32: #{tpu_custom_call.1} parent=1 // pred_region
      %93 = dma.done [#allocation3], 256
    $region33: #{tpu_custom_call.1} parent=1 // pred_fallthru
      _
    // Predicated region
    $region34: #{tpu_custom_call.1} parent=1 // pred_check
      _
    $region35: #{tpu_custom_call.1} parent=1 // pred_check_branch
      %95 = sbr.rel (0) target = $region37
    $region36: #{tpu_custom_call.1} parent=1 // pred_region
      %96 = dma.done [#allocation6], 2048
    $region37: #{tpu_custom_call.1} parent=1 // pred_fallthru
      _
    // Predicated region
    $region38: #{tpu_custom_call.1} parent=1 // pred_check
      _
    $region39: #{tpu_custom_call.1} parent=1 // pred_check_branch
      %98 = sbr.rel (0) target = $region41
    $region40: #{tpu_custom_call.1} parent=1 // pred_region
      %99 = dma.done [#allocation6], 2048
    $region41: #{tpu_custom_call.1} parent=1 // pred_fallthru
      _
    // Predicated region
    $region42: #{tpu_custom_call.1} parent=1 // pred_check
      _
    $region43: #{tpu_custom_call.1} parent=1 // pred_check_branch
      %101 = sbr.rel (0) target = $region45
    $region44: #{tpu_custom_call.1} parent=1 // pred_region
      %102 = dma.done [#allocation9], 2048
    $region45: #{tpu_custom_call.1} parent=1 // pred_fallthru
      _
    // Predicated region
    $region46: #{tpu_custom_call.1} parent=1 // pred_check
      _
    $region47: #{tpu_custom_call.1} parent=1 // pred_check_branch
      %104 = sbr.rel (0) target = $region49
    $region48: #{tpu_custom_call.1} parent=1 // pred_region
      %105 = dma.done [#allocation9], 2048
    $region49: #{tpu_custom_call.1} parent=1 // pred_fallthru
      _
    // Predicated region
    $region50: #{tpu_custom_call.1} parent=1 // pred_check
      _
    $region51: #{tpu_custom_call.1} parent=1 // pred_check_branch
      %107 = sbr.rel (0) target = $region53
    $region52: #{tpu_custom_call.1} parent=1 // pred_region
      %108 = dma.done [#allocation12], 2048
    $region53: #{tpu_custom_call.1} parent=1 // pred_fallthru
      _
    %v109 = vld [vmem:[#allocation2] sm:$0xff]
    %v110 = vld [vmem:[#allocation2 + $0x8] sm:$0xff]
    %v111 = vld [vmem:[#allocation5] sm:$0xff]
    %v112 = vld [vmem:[#allocation5 + $0x8] sm:$0xff]
    %v113 = vld [vmem:[#allocation5 + $0x10] sm:$0xff]
    %v114 = vld [vmem:[#allocation5 + $0x18] sm:$0xff]
    %v115 = vld [vmem:[#allocation5 + $0x20] sm:$0xff]
    %v116 = vld [vmem:[#allocation5 + $0x28] sm:$0xff]
    %v117 = vld [vmem:[#allocation5 + $0x30] sm:$0xff]
    %v118 = vld [vmem:[#allocation5 + $0x38] sm:$0xff]
    %v119 = vld [vmem:[#allocation5 + $0x40] sm:$0xff]
    %v120 = vld [vmem:[#allocation5 + $0x48] sm:$0xff]
    %v121 = vld [vmem:[#allocation5 + $0x50] sm:$0xff]
    %v122 = vld [vmem:[#allocation5 + $0x58] sm:$0xff]
    %v123 = vld [vmem:[#allocation5 + $0x60] sm:$0xff]
    %v124 = vld [vmem:[#allocation5 + $0x68] sm:$0xff]
    %v125 = vld [vmem:[#allocation5 + $0x70] sm:$0xff]
    %v126 = vld [vmem:[#allocation5 + $0x78] sm:$0xff]
    %v127 = vld [vmem:[%s6] sm:$0x1]
    %v128 = vlaneseq
    %v129 = vshrl.u32 %v128, 7
    %v130 = vsub.s32 0, %v129
    %v131 = vrot.slane %v127, %v130
    %132 = vmatprep.subr.mxu0 0.0
    %133 = vmatpush1.msra.mxu0 %v126
    %134 = vmatprep.subr.mxu0 0.0
    %135 = vmatpush1.msra.mxu0 %v125
    %136 = vmatprep.subr.mxu0 0.0
    %137 = vmatpush1.msra.mxu0 %v124
    %138 = vmatprep.subr.mxu0 0.0
    %139 = vmatpush1.msra.mxu0 %v123
    %140 = vmatprep.subr.mxu0 0.0
    %141 = vmatpush1.msra.mxu0 %v122
    %142 = vmatprep.subr.mxu0 0.0
    %143 = vmatpush1.msra.mxu0 %v121
    %144 = vmatprep.subr.mxu0 0.0
    %145 = vmatpush1.msra.mxu0 %v120
    %146 = vmatprep.subr.mxu0 0.0
    %147 = vmatpush1.msra.mxu0 %v119
    %148 = vmatprep.subr.mxu0 0.0
    %149 = vmatpush1.msra.mxu0 %v118
    %150 = vmatprep.subr.mxu0 0.0
    %151 = vmatpush1.msra.mxu0 %v117
    %152 = vmatprep.subr.mxu0 0.0
    %153 = vmatpush1.msra.mxu0 %v116
    %154 = vmatprep.subr.mxu0 0.0
    %155 = vmatpush1.msra.mxu0 %v115
    %156 = vmatprep.subr.mxu0 0.0
    %157 = vmatpush1.msra.mxu0 %v114
    %158 = vmatprep.subr.mxu0 0.0
    %159 = vmatpush1.msra.mxu0 %v113
    %160 = vmatprep.subr.mxu0 0.0
    %161 = vmatpush1.msra.mxu0 %v112
    %162 = vmatprep.subr.mxu0 0.0
    %163 = vmatpush1.msra.mxu0 %v111
    %164 = vmatprep.subr.mxu0 0.0
    %165 = vmatpush2.msra.mxu0 0.0
    %166 = vmatprep.subr.mxu0 0.0
    %167 = vmatpush2.msra.mxu0 0.0
    %168 = vmatprep.subr.mxu0 0.0
    %169 = vmatpush2.msra.mxu0 0.0
    %170 = vmatprep.subr.mxu0 0.0
    %171 = vmatpush2.msra.mxu0 0.0
    %172 = vmatprep.subr.mxu0 0.0
    %173 = vmatpush2.msra.mxu0 0.0
    %174 = vmatprep.subr.mxu0 0.0
    %175 = vmatpush2.msra.mxu0 0.0
    %176 = vmatprep.subr.mxu0 0.0
    %177 = vmatpush2.msra.mxu0 0.0
    %178 = vmatprep.subr.mxu0 0.0
    %179 = vmatpush2.msra.mxu0 0.0
    %180 = vmatprep.subr.mxu0 0.0
    %181 = vmatpush2.msra.mxu0 0.0
    %182 = vmatprep.subr.mxu0 0.0
    %183 = vmatpush2.msra.mxu0 0.0
    %184 = vmatprep.subr.mxu0 0.0
    %185 = vmatpush2.msra.mxu0 0.0
    %186 = vmatprep.subr.mxu0 0.0
    %187 = vmatpush2.msra.mxu0 0.0
    %188 = vmatprep.subr.mxu0 0.0
    %189 = vmatpush2.msra.mxu0 0.0
    %190 = vmatprep.subr.mxu0 0.0
    %191 = vmatpush2.msra.mxu0 0.0
    %192 = vmatprep.subr.mxu0 0.0
    %193 = vmatpush2.msra.mxu0 0.0
    %194 = vmatprep.subr.mxu0 0.0
    %195 = vmatpush2.msra.mxu0 0.0
    %196 = vmatprep.mubr.f32.mxu0 0.0
    %197 = vmatmul.mubr.f32.gmra.mxu0 %v109
    %v198 = vpop.f32.mrf.mxu0
    %v199 = vadd.f32 %v131, %v198
    %v200 = vpop.f32.mrf.mxu0
    %201 = vmatprep.mubr.f32.mxu0 0.0
    %202 = vmatmul.mubr.f32.gmra.mxu0 %v110
    %v203 = vpop.f32.mrf.mxu0
    %v204 = vadd.f32 %v131, %v203
    %v205 = vpop.f32.mrf.mxu0
    %206 = vdwg.mxu0
    %v207 = vmax.f32 %v199, 0.0
    %v208 = vmax.f32 %v204, 0.0
    %v209 = vld [vmem:[#allocation7] sm:$0xff]
    %v210 = vld [vmem:[#allocation7 + $0x8] sm:$0xff]
    %v211 = vld [vmem:[#allocation7 + $0x10] sm:$0xff]
    %v212 = vld [vmem:[#allocation7 + $0x18] sm:$0xff]
    %v213 = vld [vmem:[#allocation7 + $0x20] sm:$0xff]
    %v214 = vld [vmem:[#allocation7 + $0x28] sm:$0xff]
    %v215 = vld [vmem:[#allocation7 + $0x30] sm:$0xff]
    %v216 = vld [vmem:[#allocation7 + $0x38] sm:$0xff]
    %v217 = vld [vmem:[#allocation7 + $0x40] sm:$0xff]
    %v218 = vld [vmem:[#allocation7 + $0x48] sm:$0xff]
    %v219 = vld [vmem:[#allocation7 + $0x50] sm:$0xff]
    %v220 = vld [vmem:[#allocation7 + $0x58] sm:$0xff]
    %v221 = vld [vmem:[#allocation7 + $0x60] sm:$0xff]
    %v222 = vld [vmem:[#allocation7 + $0x68] sm:$0xff]
    %v223 = vld [vmem:[#allocation7 + $0x70] sm:$0xff]
    %v224 = vld [vmem:[#allocation7 + $0x78] sm:$0xff]
    %v225 = vld [vmem:[%s6 + $0x1] sm:$0x1]
    %v226 = vlaneseq
    %v227 = vshrl.u32 %v226, 7
    %v228 = vsub.s32 0, %v227
    %v229 = vrot.slane %v225, %v228
    %230 = vmatprep.subr.mxu0 0.0
    %231 = vmatpush1.msra.mxu0 %v224
    %232 = vmatprep.subr.mxu0 0.0
    %233 = vmatpush1.msra.mxu0 %v223
    %234 = vmatprep.subr.mxu0 0.0
    %235 = vmatpush1.msra.mxu0 %v222
    %236 = vmatprep.subr.mxu0 0.0
    %237 = vmatpush1.msra.mxu0 %v221
    %238 = vmatprep.subr.mxu0 0.0
    %239 = vmatpush1.msra.mxu0 %v220
    %240 = vmatprep.subr.mxu0 0.0
    %241 = vmatpush1.msra.mxu0 %v219
    %242 = vmatprep.subr.mxu0 0.0
    %243 = vmatpush1.msra.mxu0 %v218
    %244 = vmatprep.subr.mxu0 0.0
    %245 = vmatpush1.msra.mxu0 %v217
    %246 = vmatprep.subr.mxu0 0.0
    %247 = vmatpush1.msra.mxu0 %v216
    %248 = vmatprep.subr.mxu0 0.0
    %249 = vmatpush1.msra.mxu0 %v215
    %250 = vmatprep.subr.mxu0 0.0
    %251 = vmatpush1.msra.mxu0 %v214
    %252 = vmatprep.subr.mxu0 0.0
    %253 = vmatpush1.msra.mxu0 %v213
    %254 = vmatprep.subr.mxu0 0.0
    %255 = vmatpush1.msra.mxu0 %v212
    %256 = vmatprep.subr.mxu0 0.0
    %257 = vmatpush1.msra.mxu0 %v211
    %258 = vmatprep.subr.mxu0 0.0
    %259 = vmatpush1.msra.mxu0 %v210
    %260 = vmatprep.subr.mxu0 0.0
    %261 = vmatpush1.msra.mxu0 %v209
    %262 = vmatprep.subr.mxu0 0.0
    %263 = vmatpush2.msra.mxu0 0.0
    %264 = vmatprep.subr.mxu0 0.0
    %265 = vmatpush2.msra.mxu0 0.0
    %266 = vmatprep.subr.mxu0 0.0
    %267 = vmatpush2.msra.mxu0 0.0
    %268 = vmatprep.subr.mxu0 0.0
    %269 = vmatpush2.msra.mxu0 0.0
    %270 = vmatprep.subr.mxu0 0.0
    %271 = vmatpush2.msra.mxu0 0.0
    %272 = vmatprep.subr.mxu0 0.0
    %273 = vmatpush2.msra.mxu0 0.0
    %274 = vmatprep.subr.mxu0 0.0
    %275 = vmatpush2.msra.mxu0 0.0
    %276 = vmatprep.subr.mxu0 0.0
    %277 = vmatpush2.msra.mxu0 0.0
    %278 = vmatprep.subr.mxu0 0.0
    %279 = vmatpush2.msra.mxu0 0.0
    %280 = vmatprep.subr.mxu0 0.0
    %281 = vmatpush2.msra.mxu0 0.0
    %282 = vmatprep.subr.mxu0 0.0
    %283 = vmatpush2.msra.mxu0 0.0
    %284 = vmatprep.subr.mxu0 0.0
    %285 = vmatpush2.msra.mxu0 0.0
    %286 = vmatprep.subr.mxu0 0.0
    %287 = vmatpush2.msra.mxu0 0.0
    %288 = vmatprep.subr.mxu0 0.0
    %289 = vmatpush2.msra.mxu0 0.0
    %290 = vmatprep.subr.mxu0 0.0
    %291 = vmatpush2.msra.mxu0 0.0
    %292 = vmatprep.subr.mxu0 0.0
    %293 = vmatpush2.msra.mxu0 0.0
    %294 = vmatprep.mubr.f32.mxu0 0.0
    %295 = vmatmul.mubr.f32.gmra.mxu0 %v207
    %v296 = vpop.f32.mrf.mxu0
    %v297 = vadd.f32 %v229, %v296
    %v298 = vpop.f32.mrf.mxu0
    %299 = vmatprep.mubr.f32.mxu0 0.0
    %300 = vmatmul.mubr.f32.gmra.mxu0 %v208
    %v301 = vpop.f32.mrf.mxu0
    %v302 = vadd.f32 %v229, %v301
    %v303 = vpop.f32.mrf.mxu0
    %304 = vdwg.mxu0
    %v305 = vmax.f32 %v297, 0.0
    %v306 = vmax.f32 %v302, 0.0
    %v307 = vld [vmem:[#allocation8] sm:$0xff]
    %v308 = vld [vmem:[#allocation8 + $0x8] sm:$0xff]
    %v309 = vld [vmem:[#allocation8 + $0x10] sm:$0xff]
    %v310 = vld [vmem:[#allocation8 + $0x18] sm:$0xff]
    %v311 = vld [vmem:[#allocation8 + $0x20] sm:$0xff]
    %v312 = vld [vmem:[#allocation8 + $0x28] sm:$0xff]
    %v313 = vld [vmem:[#allocation8 + $0x30] sm:$0xff]
    %v314 = vld [vmem:[#allocation8 + $0x38] sm:$0xff]
    %v315 = vld [vmem:[#allocation8 + $0x40] sm:$0xff]
    %v316 = vld [vmem:[#allocation8 + $0x48] sm:$0xff]
    %v317 = vld [vmem:[#allocation8 + $0x50] sm:$0xff]
    %v318 = vld [vmem:[#allocation8 + $0x58] sm:$0xff]
    %v319 = vld [vmem:[#allocation8 + $0x60] sm:$0xff]
    %v320 = vld [vmem:[#allocation8 + $0x68] sm:$0xff]
    %v321 = vld [vmem:[#allocation8 + $0x70] sm:$0xff]
    %v322 = vld [vmem:[#allocation8 + $0x78] sm:$0xff]
    %v323 = vld [vmem:[%s6 + $0x2] sm:$0x1]
    %v324 = vlaneseq
    %v325 = vshrl.u32 %v324, 7
    %v326 = vsub.s32 0, %v325
    %v327 = vrot.slane %v323, %v326
    %328 = vmatprep.subr.mxu0 0.0
    %329 = vmatpush1.msra.mxu0 %v322
    %330 = vmatprep.subr.mxu0 0.0
    %331 = vmatpush1.msra.mxu0 %v321
    %332 = vmatprep.subr.mxu0 0.0
    %333 = vmatpush1.msra.mxu0 %v320
    %334 = vmatprep.subr.mxu0 0.0
    %335 = vmatpush1.msra.mxu0 %v319
    %336 = vmatprep.subr.mxu0 0.0
    %337 = vmatpush1.msra.mxu0 %v318
    %338 = vmatprep.subr.mxu0 0.0
    %339 = vmatpush1.msra.mxu0 %v317
    %340 = vmatprep.subr.mxu0 0.0
    %341 = vmatpush1.msra.mxu0 %v316
    %342 = vmatprep.subr.mxu0 0.0
    %343 = vmatpush1.msra.mxu0 %v315
    %344 = vmatprep.subr.mxu0 0.0
    %345 = vmatpush1.msra.mxu0 %v314
    %346 = vmatprep.subr.mxu0 0.0
    %347 = vmatpush1.msra.mxu0 %v313
    %348 = vmatprep.subr.mxu0 0.0
    %349 = vmatpush1.msra.mxu0 %v312
    %350 = vmatprep.subr.mxu0 0.0
    %351 = vmatpush1.msra.mxu0 %v311
    %352 = vmatprep.subr.mxu0 0.0
    %353 = vmatpush1.msra.mxu0 %v310
    %354 = vmatprep.subr.mxu0 0.0
    %355 = vmatpush1.msra.mxu0 %v309
    %356 = vmatprep.subr.mxu0 0.0
    %357 = vmatpush1.msra.mxu0 %v308
    %358 = vmatprep.subr.mxu0 0.0
    %359 = vmatpush1.msra.mxu0 %v307
    %360 = vmatprep.subr.mxu0 0.0
    %361 = vmatpush2.msra.mxu0 0.0
    %362 = vmatprep.subr.mxu0 0.0
    %363 = vmatpush2.msra.mxu0 0.0
    %364 = vmatprep.subr.mxu0 0.0
    %365 = vmatpush2.msra.mxu0 0.0
    %366 = vmatprep.subr.mxu0 0.0
    %367 = vmatpush2.msra.mxu0 0.0
    %368 = vmatprep.subr.mxu0 0.0
    %369 = vmatpush2.msra.mxu0 0.0
    %370 = vmatprep.subr.mxu0 0.0
    %371 = vmatpush2.msra.mxu0 0.0
    %372 = vmatprep.subr.mxu0 0.0
    %373 = vmatpush2.msra.mxu0 0.0
    %374 = vmatprep.subr.mxu0 0.0
    %375 = vmatpush2.msra.mxu0 0.0
    %376 = vmatprep.subr.mxu0 0.0
    %377 = vmatpush2.msra.mxu0 0.0
    %378 = vmatprep.subr.mxu0 0.0
    %379 = vmatpush2.msra.mxu0 0.0
    %380 = vmatprep.subr.mxu0 0.0
    %381 = vmatpush2.msra.mxu0 0.0
    %382 = vmatprep.subr.mxu0 0.0
    %383 = vmatpush2.msra.mxu0 0.0
    %384 = vmatprep.subr.mxu0 0.0
    %385 = vmatpush2.msra.mxu0 0.0
    %386 = vmatprep.subr.mxu0 0.0
    %387 = vmatpush2.msra.mxu0 0.0
    %388 = vmatprep.subr.mxu0 0.0
    %389 = vmatpush2.msra.mxu0 0.0
    %390 = vmatprep.subr.mxu0 0.0
    %391 = vmatpush2.msra.mxu0 0.0
    %392 = vmatprep.mubr.f32.mxu0 0.0
    %393 = vmatmul.mubr.f32.gmra.mxu0 %v305
    %v394 = vpop.f32.mrf.mxu0
    %v395 = vadd.f32 %v327, %v394
    %v396 = vpop.f32.mrf.mxu0
    %397 = vmatprep.mubr.f32.mxu0 0.0
    %398 = vmatmul.mubr.f32.gmra.mxu0 %v306
    %v399 = vpop.f32.mrf.mxu0
    %v400 = vadd.f32 %v327, %v399
    %v401 = vpop.f32.mrf.mxu0
    %402 = vdwg.mxu0
    %v403 = vmax.f32 %v395, 0.0
    %v404 = vmax.f32 %v400, 0.0
    %v405 = vld [vmem:[#allocation10] sm:$0xff]
    %v406 = vld [vmem:[#allocation10 + $0x8] sm:$0xff]
    %v407 = vld [vmem:[#allocation10 + $0x10] sm:$0xff]
    %v408 = vld [vmem:[#allocation10 + $0x18] sm:$0xff]
    %v409 = vld [vmem:[#allocation10 + $0x20] sm:$0xff]
    %v410 = vld [vmem:[#allocation10 + $0x28] sm:$0xff]
    %v411 = vld [vmem:[#allocation10 + $0x30] sm:$0xff]
    %v412 = vld [vmem:[#allocation10 + $0x38] sm:$0xff]
    %v413 = vld [vmem:[#allocation10 + $0x40] sm:$0xff]
    %v414 = vld [vmem:[#allocation10 + $0x48] sm:$0xff]
    %v415 = vld [vmem:[#allocation10 + $0x50] sm:$0xff]
    %v416 = vld [vmem:[#allocation10 + $0x58] sm:$0xff]
    %v417 = vld [vmem:[#allocation10 + $0x60] sm:$0xff]
    %v418 = vld [vmem:[#allocation10 + $0x68] sm:$0xff]
    %v419 = vld [vmem:[#allocation10 + $0x70] sm:$0xff]
    %v420 = vld [vmem:[#allocation10 + $0x78] sm:$0xff]
    %v421 = vld [vmem:[%s6 + $0x3] sm:$0x1]
    %v422 = vlaneseq
    %v423 = vshrl.u32 %v422, 7
    %v424 = vsub.s32 0, %v423
    %v425 = vrot.slane %v421, %v424
    %426 = vmatprep.subr.mxu0 0.0
    %427 = vmatpush1.msra.mxu0 %v420
    %428 = vmatprep.subr.mxu0 0.0
    %429 = vmatpush1.msra.mxu0 %v419
    %430 = vmatprep.subr.mxu0 0.0
    %431 = vmatpush1.msra.mxu0 %v418
    %432 = vmatprep.subr.mxu0 0.0
    %433 = vmatpush1.msra.mxu0 %v417
    %434 = vmatprep.subr.mxu0 0.0
    %435 = vmatpush1.msra.mxu0 %v416
    %436 = vmatprep.subr.mxu0 0.0
    %437 = vmatpush1.msra.mxu0 %v415
    %438 = vmatprep.subr.mxu0 0.0
    %439 = vmatpush1.msra.mxu0 %v414
    %440 = vmatprep.subr.mxu0 0.0
    %441 = vmatpush1.msra.mxu0 %v413
    %442 = vmatprep.subr.mxu0 0.0
    %443 = vmatpush1.msra.mxu0 %v412
    %444 = vmatprep.subr.mxu0 0.0
    %445 = vmatpush1.msra.mxu0 %v411
    %446 = vmatprep.subr.mxu0 0.0
    %447 = vmatpush1.msra.mxu0 %v410
    %448 = vmatprep.subr.mxu0 0.0
    %449 = vmatpush1.msra.mxu0 %v409
    %450 = vmatprep.subr.mxu0 0.0
    %451 = vmatpush1.msra.mxu0 %v408
    %452 = vmatprep.subr.mxu0 0.0
    %453 = vmatpush1.msra.mxu0 %v407
    %454 = vmatprep.subr.mxu0 0.0
    %455 = vmatpush1.msra.mxu0 %v406
    %456 = vmatprep.subr.mxu0 0.0
    %457 = vmatpush1.msra.mxu0 %v405
    %458 = vmatprep.subr.mxu0 0.0
    %459 = vmatpush2.msra.mxu0 0.0
    %460 = vmatprep.subr.mxu0 0.0
    %461 = vmatpush2.msra.mxu0 0.0
    %462 = vmatprep.subr.mxu0 0.0
    %463 = vmatpush2.msra.mxu0 0.0
    %464 = vmatprep.subr.mxu0 0.0
    %465 = vmatpush2.msra.mxu0 0.0
    %466 = vmatprep.subr.mxu0 0.0
    %467 = vmatpush2.msra.mxu0 0.0
    %468 = vmatprep.subr.mxu0 0.0
    %469 = vmatpush2.msra.mxu0 0.0
    %470 = vmatprep.subr.mxu0 0.0
    %471 = vmatpush2.msra.mxu0 0.0
    %472 = vmatprep.subr.mxu0 0.0
    %473 = vmatpush2.msra.mxu0 0.0
    %474 = vmatprep.subr.mxu0 0.0
    %475 = vmatpush2.msra.mxu0 0.0
    %476 = vmatprep.subr.mxu0 0.0
    %477 = vmatpush2.msra.mxu0 0.0
    %478 = vmatprep.subr.mxu0 0.0
    %479 = vmatpush2.msra.mxu0 0.0
    %480 = vmatprep.subr.mxu0 0.0
    %481 = vmatpush2.msra.mxu0 0.0
    %482 = vmatprep.subr.mxu0 0.0
    %483 = vmatpush2.msra.mxu0 0.0
    %484 = vmatprep.subr.mxu0 0.0
    %485 = vmatpush2.msra.mxu0 0.0
    %486 = vmatprep.subr.mxu0 0.0
    %487 = vmatpush2.msra.mxu0 0.0
    %488 = vmatprep.subr.mxu0 0.0
    %489 = vmatpush2.msra.mxu0 0.0
    %490 = vmatprep.mubr.f32.mxu0 0.0
    %491 = vmatmul.mubr.f32.gmra.mxu0 %v403
    %v492 = vpop.f32.mrf.mxu0
    %v493 = vadd.f32 %v425, %v492
    %v494 = vpop.f32.mrf.mxu0
    %495 = vmatprep.mubr.f32.mxu0 0.0
    %496 = vmatmul.mubr.f32.gmra.mxu0 %v404
    %v497 = vpop.f32.mrf.mxu0
    %v498 = vadd.f32 %v425, %v497
    %v499 = vpop.f32.mrf.mxu0
    %500 = vdwg.mxu0
    %v501 = vmax.f32 %v493, 0.0
    %v502 = vmax.f32 %v498, 0.0
    %v503 = vld [vmem:[#allocation11] sm:$0xff]
    %v504 = vld [vmem:[#allocation11 + $0x8] sm:$0xff]
    %v505 = vld [vmem:[#allocation11 + $0x10] sm:$0xff]
    %v506 = vld [vmem:[#allocation11 + $0x18] sm:$0xff]
    %v507 = vld [vmem:[#allocation11 + $0x20] sm:$0xff]
    %v508 = vld [vmem:[#allocation11 + $0x28] sm:$0xff]
    %v509 = vld [vmem:[#allocation11 + $0x30] sm:$0xff]
    %v510 = vld [vmem:[#allocation11 + $0x38] sm:$0xff]
    %v511 = vld [vmem:[#allocation11 + $0x40] sm:$0xff]
    %v512 = vld [vmem:[#allocation11 + $0x48] sm:$0xff]
    %v513 = vld [vmem:[#allocation11 + $0x50] sm:$0xff]
    %v514 = vld [vmem:[#allocation11 + $0x58] sm:$0xff]
    %v515 = vld [vmem:[#allocation11 + $0x60] sm:$0xff]
    %v516 = vld [vmem:[#allocation11 + $0x68] sm:$0xff]
    %v517 = vld [vmem:[#allocation11 + $0x70] sm:$0xff]
    %v518 = vld [vmem:[#allocation11 + $0x78] sm:$0xff]
    %v519 = vld [vmem:[%s6 + $0x4] sm:$0x1]
    %v520 = vlaneseq
    %v521 = vshrl.u32 %v520, 7
    %v522 = vsub.s32 0, %v521
    %v523 = vrot.slane %v519, %v522
    %524 = vmatprep.subr.mxu0 0.0
    %525 = vmatpush1.msra.mxu0 %v518
    %526 = vmatprep.subr.mxu0 0.0
    %527 = vmatpush1.msra.mxu0 %v517
    %528 = vmatprep.subr.mxu0 0.0
    %529 = vmatpush1.msra.mxu0 %v516
    %530 = vmatprep.subr.mxu0 0.0
    %531 = vmatpush1.msra.mxu0 %v515
    %532 = vmatprep.subr.mxu0 0.0
    %533 = vmatpush1.msra.mxu0 %v514
    %534 = vmatprep.subr.mxu0 0.0
    %535 = vmatpush1.msra.mxu0 %v513
    %536 = vmatprep.subr.mxu0 0.0
    %537 = vmatpush1.msra.mxu0 %v512
    %538 = vmatprep.subr.mxu0 0.0
    %539 = vmatpush1.msra.mxu0 %v511
    %540 = vmatprep.subr.mxu0 0.0
    %541 = vmatpush1.msra.mxu0 %v510
    %542 = vmatprep.subr.mxu0 0.0
    %543 = vmatpush1.msra.mxu0 %v509
    %544 = vmatprep.subr.mxu0 0.0
    %545 = vmatpush1.msra.mxu0 %v508
    %546 = vmatprep.subr.mxu0 0.0
    %547 = vmatpush1.msra.mxu0 %v507
    %548 = vmatprep.subr.mxu0 0.0
    %549 = vmatpush1.msra.mxu0 %v506
    %550 = vmatprep.subr.mxu0 0.0
    %551 = vmatpush1.msra.mxu0 %v505
    %552 = vmatprep.subr.mxu0 0.0
    %553 = vmatpush1.msra.mxu0 %v504
    %554 = vmatprep.subr.mxu0 0.0
    %555 = vmatpush1.msra.mxu0 %v503
    %556 = vmatprep.subr.mxu0 0.0
    %557 = vmatpush2.msra.mxu0 0.0
    %558 = vmatprep.subr.mxu0 0.0
    %559 = vmatpush2.msra.mxu0 0.0
    %560 = vmatprep.subr.mxu0 0.0
    %561 = vmatpush2.msra.mxu0 0.0
    %562 = vmatprep.subr.mxu0 0.0
    %563 = vmatpush2.msra.mxu0 0.0
    %564 = vmatprep.subr.mxu0 0.0
    %565 = vmatpush2.msra.mxu0 0.0
    %566 = vmatprep.subr.mxu0 0.0
    %567 = vmatpush2.msra.mxu0 0.0
    %568 = vmatprep.subr.mxu0 0.0
    %569 = vmatpush2.msra.mxu0 0.0
    %570 = vmatprep.subr.mxu0 0.0
    %571 = vmatpush2.msra.mxu0 0.0
    %572 = vmatprep.subr.mxu0 0.0
    %573 = vmatpush2.msra.mxu0 0.0
    %574 = vmatprep.subr.mxu0 0.0
    %575 = vmatpush2.msra.mxu0 0.0
    %576 = vmatprep.subr.mxu0 0.0
    %577 = vmatpush2.msra.mxu0 0.0
    %578 = vmatprep.subr.mxu0 0.0
    %579 = vmatpush2.msra.mxu0 0.0
    %580 = vmatprep.subr.mxu0 0.0
    %581 = vmatpush2.msra.mxu0 0.0
    %582 = vmatprep.subr.mxu0 0.0
    %583 = vmatpush2.msra.mxu0 0.0
    %584 = vmatprep.subr.mxu0 0.0
    %585 = vmatpush2.msra.mxu0 0.0
    %586 = vmatprep.subr.mxu0 0.0
    %587 = vmatpush2.msra.mxu0 0.0
    %588 = vmatprep.mubr.f32.mxu0 0.0
    %589 = vmatmul.mubr.f32.gmra.mxu0 %v501
    %v590 = vpop.f32.mrf.mxu0
    %v591 = vadd.f32 %v523, %v590
    %v592 = vpop.f32.mrf.mxu0
    %593 = vmatprep.mubr.f32.mxu0 0.0
    %594 = vmatmul.mubr.f32.gmra.mxu0 %v502
    %v595 = vpop.f32.mrf.mxu0
    %v596 = vadd.f32 %v523, %v595
    %v597 = vpop.f32.mrf.mxu0
    %598 = vdwg.mxu0
    %v599 = vmax.f32 %v591, 0.0
    %v600 = vmax.f32 %v596, 0.0
    %601 = vst [vmem:[#allocation13] sm:$0xff] %v599
    %602 = vst [vmem:[#allocation13 + $0x8] sm:$0xff] %v600
    // Predicated region
    $region54: #{tpu_custom_call.1} parent=1 // pred_check
      _
    $region55: #{tpu_custom_call.1} parent=1 // pred_check_branch
      %604 = sbr.rel (0) target = $region57
    $region56: #{tpu_custom_call.1} parent=1 // pred_region
      %s606 = ssub.s32 256, 256
      %607 = vsyncadd [#allocation4], %s606
      %s608 = sshll.u32 [#allocation13], 4
      %s609 = int_to_ptr.vmem [resolvable:$true] %s608
      %614 = dma.vmem_to_hbm [thread:$0]  %s609, 256, %s7, [#allocation4], 128, 128, 8
    $region57: #{tpu_custom_call.1} parent=1 // pred_fallthru
      _
    // Predicated region
    $region58: #{tpu_custom_call.1} parent=1 // pred_check
      _
    $region59: #{tpu_custom_call.1} parent=1 // pred_check_branch
      %616 = sbr.rel (0) target = $region61
    $region60: #{tpu_custom_call.1} parent=1 // pred_region
      %617 = dma.done [#allocation4], 256
    $region61: #{tpu_custom_call.1} parent=1 // pred_fallthru
      _
    %618 = vsyncpa [#allocation3], 1
    %619 = vsyncpa [#allocation6], 1
    %620 = vsyncpa [#allocation9], 1
    %621 = vsyncpa [#allocation12], 1
    %622 = vsyncpa [#allocation4], 1

// kernel: tpu_custom_call.1
$region0: #{tpu_custom_call.1}
  #allocation0 [shape = 'u32[]', space=smem, size = 0x4, offset = 0x4, fixed_abs, tag = 'smem constant byte address 0x4 - core index']
  #allocation1 [shape = 'u32[144,128]{1,0:T(1,128)}', space=vmem, size = 0x12000, scoped, tag = 'internal scratch']
  %s0 = inlined_call_operand.hbm [shape: f32[16,128], index: 0, kind: input, shape index: {}]
  %s1 = inlined_call_operand.hbm [shape: f32[128,128], index: 1, kind: input, shape index: {}]
  %s2 = inlined_call_operand.hbm [shape: f32[128,128], index: 2, kind: input, shape index: {}]
  %s3 = inlined_call_operand.hbm [shape: f32[128,128], index: 3, kind: input, shape index: {}]
  %s4 = inlined_call_operand.hbm [shape: f32[128,128], index: 4, kind: input, shape index: {}]
  %s5 = inlined_call_operand.hbm [shape: f32[128,128], index: 5, kind: input, shape index: {}]
  %s6 = inlined_call_operand.vmem [shape: f32[8,128], index: 6, kind: input, shape index: {}]
  %s7 = inlined_call_operand.hbm [shape: f32[16,128], index: 7, kind: output, shape index: {}]
  %s8 = sld [smem:[#allocation0]]
  $region62: #{tpu_custom_call.1} parent=0
    _
  %s10 = ssub.s32 1, %s8
  %s11 = scalar_select 0, %s10, %s8
  $region1: #{tpu_custom_call.1} parent=0
    #allocation2 [shape = 'u8[8192]{0}', space=vmem, size = 0x2000, scoped, tag = 'input window, operand 0, single buffered']
    #allocation3 [shape = 's32[1]{0}', space=sflag, size = 0x4, scoped, tag = 'scoped memory for tpu_custom_call.1']
    #allocation4 [shape = 's32[1]{0}', space=sflag, size = 0x4, scoped, tag = 'scoped memory for tpu_custom_call.1']
    #allocation5 [shape = 'u8[65536]{0}', space=vmem, size = 0x10000, scoped, tag = 'input window, operand 1, single buffered']
    #allocation6 [shape = 's32[1]{0}', space=sflag, size = 0x4, scoped, tag = 'scoped memory for tpu_custom_call.1']
    #allocation7 [shape = 'u8[65536]{0}', space=vmem, size = 0x10000, scoped, tag = 'input window, operand 2, single buffered']
    #allocation8 [shape = 'u8[65536]{0}', space=vmem, size = 0x10000, scoped, tag = 'input window, operand 3, single buffered']
    #allocation9 [shape = 's32[1]{0}', space=sflag, size = 0x4, scoped, tag = 'scoped memory for tpu_custom_call.1']
    #allocation10 [shape = 'u8[65536]{0}', space=vmem, size = 0x10000, scoped, tag = 'input window, operand 4, single buffered']
    #allocation11 [shape = 'u8[65536]{0}', space=vmem, size = 0x10000, scoped, tag = 'input window, operand 5, single buffered']
    #allocation12 [shape = 's32[1]{0}', space=sflag, size = 0x4, scoped, tag = 'scoped memory for tpu_custom_call.1']
    #allocation13 [shape = 'u8[8192]{0}', space=vmem, size = 0x2000, scoped, tag = 'output window, operand 0, single buffered']
    %12 = vsyncpa [#allocation3], 0
    %13 = vsyncpa [#allocation6], 0
    %14 = vsyncpa [#allocation9], 0
    %15 = vsyncpa [#allocation12], 0
    %16 = vsyncpa [#allocation4], 0
    // Predicated region
    $region2: #{tpu_custom_call.1} parent=1 // pred_check
      _
    $region3: #{tpu_custom_call.1} parent=1 // pred_check_branch
      %18 = sbr.rel (0) target = $region5
    $region4: #{tpu_custom_call.1} parent=1 // pred_region
      %s20 = ssub.s32 256, 256
      %21 = vsyncadd [#allocation3], %s20
      %s22 = sshll.u32 [#allocation2], 4
      %s23 = int_to_ptr.vmem [resolvable:$true] %s22
      %28 = dma.hbm_to_vmem [thread:$0]  %s0, 256, %s23, [#allocation3], 128, 128, 8
    $region5: #{tpu_custom_call.1} parent=1 // pred_fallthru
      _
    // Predicated region
    $region6: #{tpu_custom_call.1} parent=1 // pred_check
      _
    $region7: #{tpu_custom_call.1} parent=1 // pred_check_branch
      %30 = sbr.rel (0) target = $region9
    $region8: #{tpu_custom_call.1} parent=1 // pred_region
      %s32 = ssub.s32 2048, 2048
      %33 = vsyncadd [#allocation6], %s32
      %s34 = sshll.u32 [#allocation5], 4
      %s35 = int_to_ptr.vmem [resolvable:$true] %s34
      %40 = dma.hbm_to_vmem [thread:$0]  %s1, 2048, %s35, [#allocation6], 128, 128, 8
    $region9: #{tpu_custom_call.1} parent=1 // pred_fallthru
      _
    // Predicated region
    $region10: #{tpu_custom_call.1} parent=1 // pred_check
      _
    $region11: #{tpu_custom_call.1} parent=1 // pred_check_branch
      %42 = sbr.rel (0) target = $region13
    $region12: #{tpu_custom_call.1} parent=1 // pred_region
      %s44 = ssub.s32 2048, 2048
      %45 = vsyncadd [#allocation6], %s44
      %s46 = sshll.u32 [#allocation7], 4
      %s47 = int_to_ptr.vmem [resolvable:$true] %s46
      %52 = dma.hbm_to_vmem [thread:$0]  %s2, 2048, %s47, [#allocation6], 128, 128, 8
    $region13: #{tpu_custom_call.1} parent=1 // pred_fallthru
      _
    // Predicated region
    $region14: #{tpu_custom_call.1} parent=1 // pred_check
      _
    $region15: #{tpu_custom_call.1} parent=1 // pred_check_branch
      %54 = sbr.rel (0) target = $region17
    $region16: #{tpu_custom_call.1} parent=1 // pred_region
      %s56 = ssub.s32 2048, 2048
      %57 = vsyncadd [#allocation9], %s56
      %s58 = sshll.u32 [#allocation8], 4
      %s59 = int_to_ptr.vmem [resolvable:$true] %s58
      %64 = dma.hbm_to_vmem [thread:$0]  %s3, 2048, %s59, [#allocation9], 128, 128, 8
    $region17: #{tpu_custom_call.1} parent=1 // pred_fallthru
      _
    // Predicated region
    $region18: #{tpu_custom_call.1} parent=1 // pred_check
      _
    $region19: #{tpu_custom_call.1} parent=1 // pred_check_branch
      %66 = sbr.rel (0) target = $region21
    $region20: #{tpu_custom_call.1} parent=1 // pred_region
      %s68 = ssub.s32 2048, 2048
      %69 = vsyncadd [#allocation9], %s68
      %s70 = sshll.u32 [#allocation10], 4
      %s71 = int_to_ptr.vmem [resolvable:$true] %s70
      %76 = dma.hbm_to_vmem [thread:$0]  %s4, 2048, %s71, [#allocation9], 128, 128, 8
    $region21: #{tpu_custom_call.1} parent=1 // pred_fallthru
      _
    // Predicated region
    $region22: #{tpu_custom_call.1} parent=1 // pred_check
      _
    $region23: #{tpu_custom_call.1} parent=1 // pred_check_branch
      %78 = sbr.rel (0) target = $region25
    $region24: #{tpu_custom_call.1} parent=1 // pred_region
      %s80 = ssub.s32 2048, 2048
      %81 = vsyncadd [#allocation12], %s80
      %s82 = sshll.u32 [#allocation11], 4
      %s83 = int_to_ptr.vmem [resolvable:$true] %s82
      %88 = dma.hbm_to_vmem [thread:$0]  %s5, 2048, %s83, [#allocation12], 128, 128, 8
    $region25: #{tpu_custom_call.1} parent=1 // pred_fallthru
      _
    // Predicated region
    $region26: #{tpu_custom_call.1} parent=1 // pred_check
      _
    $region27: #{tpu_custom_call.1} parent=1 // pred_check_branch
      %90 = sbr.rel (0) target = $region29
    $region28: #{tpu_custom_call.1} parent=1 // pred_region
      _
    $region29: #{tpu_custom_call.1} parent=1 // pred_fallthru
      _
    // Predicated region
    $region30: #{tpu_custom_call.1} parent=1 // pred_check
      _
    $region31: #{tpu_custom_call.1} parent=1 // pred_check_branch
      %92 = sbr.rel (0) target = $region33
    $region32: #{tpu_custom_call.1} parent=1 // pred_region
      %93 = dma.done [#allocation3], 256
    $region33: #{tpu_custom_call.1} parent=1 // pred_fallthru
      _
    // Predicated region
    $region34: #{tpu_custom_call.1} parent=1 // pred_check
      _
    $region35: #{tpu_custom_call.1} parent=1 // pred_check_branch
      %95 = sbr.rel (0) target = $region37
    $region36: #{tpu_custom_call.1} parent=1 // pred_region
      %96 = dma.done [#allocation6], 2048
    $region37: #{tpu_custom_call.1} parent=1 // pred_fallthru
      _
    // Predicated region
    $region38: #{tpu_custom_call.1} parent=1 // pred_check
      _
    $region39: #{tpu_custom_call.1} parent=1 // pred_check_branch
      %98 = sbr.rel (0) target = $region41
    $region40: #{tpu_custom_call.1} parent=1 // pred_region
      %99 = dma.done [#allocation6], 2048
    $region41: #{tpu_custom_call.1} parent=1 // pred_fallthru
      _
    // Predicated region
    $region42: #{tpu_custom_call.1} parent=1 // pred_check
      _
    $region43: #{tpu_custom_call.1} parent=1 // pred_check_branch
      %101 = sbr.rel (0) target = $region45
    $region44: #{tpu_custom_call.1} parent=1 // pred_region
      %102 = dma.done [#allocation9], 2048
    $region45: #{tpu_custom_call.1} parent=1 // pred_fallthru
      _
    // Predicated region
    $region46: #{tpu_custom_call.1} parent=1 // pred_check
      _
    $region47: #{tpu_custom_call.1} parent=1 // pred_check_branch
      %104 = sbr.rel (0) target = $region49
    $region48: #{tpu_custom_call.1} parent=1 // pred_region
      %105 = dma.done [#allocation9], 2048
    $region49: #{tpu_custom_call.1} parent=1 // pred_fallthru
      _
    // Predicated region
    $region50: #{tpu_custom_call.1} parent=1 // pred_check
      _
    $region51: #{tpu_custom_call.1} parent=1 // pred_check_branch
      %107 = sbr.rel (0) target = $region53
    $region52: #{tpu_custom_call.1} parent=1 // pred_region
      %108 = dma.done [#allocation12], 2048
    $region53: #{tpu_custom_call.1} parent=1 // pred_fallthru
      _
    %v109 = vld [vmem:[#allocation2] sm:$0xff]
    %v110 = vld [vmem:[#allocation2 + $0x8] sm:$0xff]
    %v111 = vld [vmem:[#allocation5] sm:$0xff]
    %v112 = vld [vmem:[#allocation5 + $0x8] sm:$0xff]
    %v113 = vld [vmem:[#allocation5 + $0x10] sm:$0xff]
    %v114 = vld [vmem:[#allocation5 + $0x18] sm:$0xff]
    %v115 = vld [vmem:[#allocation5 + $0x20] sm:$0xff]
    %v116 = vld [vmem:[#allocation5 + $0x28] sm:$0xff]
    %v117 = vld [vmem:[#allocation5 + $0x30] sm:$0xff]
    %v118 = vld [vmem:[#allocation5 + $0x38] sm:$0xff]
    %v119 = vld [vmem:[#allocation5 + $0x40] sm:$0xff]
    %v120 = vld [vmem:[#allocation5 + $0x48] sm:$0xff]
    %v121 = vld [vmem:[#allocation5 + $0x50] sm:$0xff]
    %v122 = vld [vmem:[#allocation5 + $0x58] sm:$0xff]
    %v123 = vld [vmem:[#allocation5 + $0x60] sm:$0xff]
    %v124 = vld [vmem:[#allocation5 + $0x68] sm:$0xff]
    %v125 = vld [vmem:[#allocation5 + $0x70] sm:$0xff]
    %v126 = vld [vmem:[#allocation5 + $0x78] sm:$0xff]
    %v127 = vld [vmem:[%s6] sm:$0x1]
    %v128 = vlaneseq
    %v129 = vshrl.u32 %v128, 7
    %v130 = vsub.s32 0, %v129
    %v131 = vrot.slane %v127, %v130
    %132 = vmatprep.subr.mxu0 0.0
    %133 = vmatpush1.msra.mxu0 %v126
    %134 = vmatprep.subr.mxu0 0.0
    %135 = vmatpush1.msra.mxu0 %v125
    %136 = vmatprep.subr.mxu0 0.0
    %137 = vmatpush1.msra.mxu0 %v124
    %138 = vmatprep.subr.mxu0 0.0
    %139 = vmatpush1.msra.mxu0 %v123
    %140 = vmatprep.subr.mxu0 0.0
    %141 = vmatpush1.msra.mxu0 %v122
    %142 = vmatprep.subr.mxu0 0.0
    %143 = vmatpush1.msra.mxu0 %v121
    %144 = vmatprep.subr.mxu0 0.0
    %145 = vmatpush1.msra.mxu0 %v120
    %146 = vmatprep.subr.mxu0 0.0
    %147 = vmatpush1.msra.mxu0 %v119
    %148 = vmatprep.subr.mxu0 0.0
    %149 = vmatpush1.msra.mxu0 %v118
    %150 = vmatprep.subr.mxu0 0.0
    %151 = vmatpush1.msra.mxu0 %v117
    %152 = vmatprep.subr.mxu0 0.0
    %153 = vmatpush1.msra.mxu0 %v116
    %154 = vmatprep.subr.mxu0 0.0
    %155 = vmatpush1.msra.mxu0 %v115
    %156 = vmatprep.subr.mxu0 0.0
    %157 = vmatpush1.msra.mxu0 %v114
    %158 = vmatprep.subr.mxu0 0.0
    %159 = vmatpush1.msra.mxu0 %v113
    %160 = vmatprep.subr.mxu0 0.0
    %161 = vmatpush1.msra.mxu0 %v112
    %162 = vmatprep.subr.mxu0 0.0
    %163 = vmatpush1.msra.mxu0 %v111
    %164 = vmatprep.subr.mxu0 0.0
    %165 = vmatpush2.msra.mxu0 0.0
    %166 = vmatprep.subr.mxu0 0.0
    %167 = vmatpush2.msra.mxu0 0.0
    %168 = vmatprep.subr.mxu0 0.0
    %169 = vmatpush2.msra.mxu0 0.0
    %170 = vmatprep.subr.mxu0 0.0
    %171 = vmatpush2.msra.mxu0 0.0
    %172 = vmatprep.subr.mxu0 0.0
    %173 = vmatpush2.msra.mxu0 0.0
    %174 = vmatprep.subr.mxu0 0.0
    %175 = vmatpush2.msra.mxu0 0.0
    %176 = vmatprep.subr.mxu0 0.0
    %177 = vmatpush2.msra.mxu0 0.0
    %178 = vmatprep.subr.mxu0 0.0
    %179 = vmatpush2.msra.mxu0 0.0
    %180 = vmatprep.subr.mxu0 0.0
    %181 = vmatpush2.msra.mxu0 0.0
    %182 = vmatprep.subr.mxu0 0.0
    %183 = vmatpush2.msra.mxu0 0.0
    %184 = vmatprep.subr.mxu0 0.0
    %185 = vmatpush2.msra.mxu0 0.0
    %186 = vmatprep.subr.mxu0 0.0
    %187 = vmatpush2.msra.mxu0 0.0
    %188 = vmatprep.subr.mxu0 0.0
    %189 = vmatpush2.msra.mxu0 0.0
    %190 = vmatprep.subr.mxu0 0.0
    %191 = vmatpush2.msra.mxu0 0.0
    %192 = vmatprep.subr.mxu0 0.0
    %193 = vmatpush2.msra.mxu0 0.0
    %194 = vmatprep.subr.mxu0 0.0
    %195 = vmatpush2.msra.mxu0 0.0
    %196 = vmatprep.mubr.f32.mxu0 0.0
    %197 = vmatmul.mubr.f32.gmra.mxu0 %v109
    %v198 = vpop.f32.mrf.mxu0
    %v199 = vadd.f32 %v131, %v198
    %v200 = vpop.f32.mrf.mxu0
    %201 = vmatprep.mubr.f32.mxu0 0.0
    %202 = vmatmul.mubr.f32.gmra.mxu0 %v110
    %v203 = vpop.f32.mrf.mxu0
    %v204 = vadd.f32 %v131, %v203
    %v205 = vpop.f32.mrf.mxu0
    %206 = vdwg.mxu0
    %v207 = vmax.f32 %v199, 0.0
    %v208 = vmax.f32 %v204, 0.0
    %v209 = vld [vmem:[#allocation7] sm:$0xff]
    %v210 = vld [vmem:[#allocation7 + $0x8] sm:$0xff]
    %v211 = vld [vmem:[#allocation7 + $0x10] sm:$0xff]
    %v212 = vld [vmem:[#allocation7 + $0x18] sm:$0xff]
    %v213 = vld [vmem:[#allocation7 + $0x20] sm:$0xff]
    %v214 = vld [vmem:[#allocation7 + $0x28] sm:$0xff]
    %v215 = vld [vmem:[#allocation7 + $0x30] sm:$0xff]
    %v216 = vld [vmem:[#allocation7 + $0x38] sm:$0xff]
    %v217 = vld [vmem:[#allocation7 + $0x40] sm:$0xff]
    %v218 = vld [vmem:[#allocation7 + $0x48] sm:$0xff]
    %v219 = vld [vmem:[#allocation7 + $0x50] sm:$0xff]
    %v220 = vld [vmem:[#allocation7 + $0x58] sm:$0xff]
    %v221 = vld [vmem:[#allocation7 + $0x60] sm:$0xff]
    %v222 = vld [vmem:[#allocation7 + $0x68] sm:$0xff]
    %v223 = vld [vmem:[#allocation7 + $0x70] sm:$0xff]
    %v224 = vld [vmem:[#allocation7 + $0x78] sm:$0xff]
    %v225 = vld [vmem:[%s6 + $0x1] sm:$0x1]
    %v226 = vlaneseq
    %v227 = vshrl.u32 %v226, 7
    %v228 = vsub.s32 0, %v227
    %v229 = vrot.slane %v225, %v228
    %230 = vmatprep.subr.mxu0 0.0
    %231 = vmatpush1.msra.mxu0 %v224
    %232 = vmatprep.subr.mxu0 0.0
    %233 = vmatpush1.msra.mxu0 %v223
    %234 = vmatprep.subr.mxu0 0.0
    %235 = vmatpush1.msra.mxu0 %v222
    %236 = vmatprep.subr.mxu0 0.0
    %237 = vmatpush1.msra.mxu0 %v221
    %238 = vmatprep.subr.mxu0 0.0
    %239 = vmatpush1.msra.mxu0 %v220
    %240 = vmatprep.subr.mxu0 0.0
    %241 = vmatpush1.msra.mxu0 %v219
    %242 = vmatprep.subr.mxu0 0.0
    %243 = vmatpush1.msra.mxu0 %v218
    %244 = vmatprep.subr.mxu0 0.0
    %245 = vmatpush1.msra.mxu0 %v217
    %246 = vmatprep.subr.mxu0 0.0
    %247 = vmatpush1.msra.mxu0 %v216
    %248 = vmatprep.subr.mxu0 0.0
    %249 = vmatpush1.msra.mxu0 %v215
    %250 = vmatprep.subr.mxu0 0.0
    %251 = vmatpush1.msra.mxu0 %v214
    %252 = vmatprep.subr.mxu0 0.0
    %253 = vmatpush1.msra.mxu0 %v213
    %254 = vmatprep.subr.mxu0 0.0
    %255 = vmatpush1.msra.mxu0 %v212
    %256 = vmatprep.subr.mxu0 0.0
    %257 = vmatpush1.msra.mxu0 %v211
    %258 = vmatprep.subr.mxu0 0.0
    %259 = vmatpush1.msra.mxu0 %v210
    %260 = vmatprep.subr.mxu0 0.0
    %261 = vmatpush1.msra.mxu0 %v209
    %262 = vmatprep.subr.mxu0 0.0
    %263 = vmatpush2.msra.mxu0 0.0
    %264 = vmatprep.subr.mxu0 0.0
    %265 = vmatpush2.msra.mxu0 0.0
    %266 = vmatprep.subr.mxu0 0.0
    %267 = vmatpush2.msra.mxu0 0.0
    %268 = vmatprep.subr.mxu0 0.0
    %269 = vmatpush2.msra.mxu0 0.0
    %270 = vmatprep.subr.mxu0 0.0
    %271 = vmatpush2.msra.mxu0 0.0
    %272 = vmatprep.subr.mxu0 0.0
    %273 = vmatpush2.msra.mxu0 0.0
    %274 = vmatprep.subr.mxu0 0.0
    %275 = vmatpush2.msra.mxu0 0.0
    %276 = vmatprep.subr.mxu0 0.0
    %277 = vmatpush2.msra.mxu0 0.0
    %278 = vmatprep.subr.mxu0 0.0
    %279 = vmatpush2.msra.mxu0 0.0
    %280 = vmatprep.subr.mxu0 0.0
    %281 = vmatpush2.msra.mxu0 0.0
    %282 = vmatprep.subr.mxu0 0.0
    %283 = vmatpush2.msra.mxu0 0.0
    %284 = vmatprep.subr.mxu0 0.0
    %285 = vmatpush2.msra.mxu0 0.0
    %286 = vmatprep.subr.mxu0 0.0
    %287 = vmatpush2.msra.mxu0 0.0
    %288 = vmatprep.subr.mxu0 0.0
    %289 = vmatpush2.msra.mxu0 0.0
    %290 = vmatprep.subr.mxu0 0.0
    %291 = vmatpush2.msra.mxu0 0.0
    %292 = vmatprep.subr.mxu0 0.0
    %293 = vmatpush2.msra.mxu0 0.0
    %294 = vmatprep.mubr.f32.mxu0 0.0
    %295 = vmatmul.mubr.f32.gmra.mxu0 %v207
    %v296 = vpop.f32.mrf.mxu0
    %v297 = vadd.f32 %v229, %v296
    %v298 = vpop.f32.mrf.mxu0
    %299 = vmatprep.mubr.f32.mxu0 0.0
    %300 = vmatmul.mubr.f32.gmra.mxu0 %v208
    %v301 = vpop.f32.mrf.mxu0
    %v302 = vadd.f32 %v229, %v301
    %v303 = vpop.f32.mrf.mxu0
    %304 = vdwg.mxu0
    %v305 = vmax.f32 %v297, 0.0
    %v306 = vmax.f32 %v302, 0.0
    %v307 = vld [vmem:[#allocation8] sm:$0xff]
    %v308 = vld [vmem:[#allocation8 + $0x8] sm:$0xff]
    %v309 = vld [vmem:[#allocation8 + $0x10] sm:$0xff]
    %v310 = vld [vmem:[#allocation8 + $0x18] sm:$0xff]
    %v311 = vld [vmem:[#allocation8 + $0x20] sm:$0xff]
    %v312 = vld [vmem:[#allocation8 + $0x28] sm:$0xff]
    %v313 = vld [vmem:[#allocation8 + $0x30] sm:$0xff]
    %v314 = vld [vmem:[#allocation8 + $0x38] sm:$0xff]
    %v315 = vld [vmem:[#allocation8 + $0x40] sm:$0xff]
    %v316 = vld [vmem:[#allocation8 + $0x48] sm:$0xff]
    %v317 = vld [vmem:[#allocation8 + $0x50] sm:$0xff]
    %v318 = vld [vmem:[#allocation8 + $0x58] sm:$0xff]
    %v319 = vld [vmem:[#allocation8 + $0x60] sm:$0xff]
    %v320 = vld [vmem:[#allocation8 + $0x68] sm:$0xff]
    %v321 = vld [vmem:[#allocation8 + $0x70] sm:$0xff]
    %v322 = vld [vmem:[#allocation8 + $0x78] sm:$0xff]
    %v323 = vld [vmem:[%s6 + $0x2] sm:$0x1]
    %v324 = vlaneseq
    %v325 = vshrl.u32 %v324, 7
    %v326 = vsub.s32 0, %v325
    %v327 = vrot.slane %v323, %v326
    %328 = vmatprep.subr.mxu0 0.0
    %329 = vmatpush1.msra.mxu0 %v322
    %330 = vmatprep.subr.mxu0 0.0
    %331 = vmatpush1.msra.mxu0 %v321
    %332 = vmatprep.subr.mxu0 0.0
    %333 = vmatpush1.msra.mxu0 %v320
    %334 = vmatprep.subr.mxu0 0.0
    %335 = vmatpush1.msra.mxu0 %v319
    %336 = vmatprep.subr.mxu0 0.0
    %337 = vmatpush1.msra.mxu0 %v318
    %338 = vmatprep.subr.mxu0 0.0
    %339 = vmatpush1.msra.mxu0 %v317
    %340 = vmatprep.subr.mxu0 0.0
    %341 = vmatpush1.msra.mxu0 %v316
    %342 = vmatprep.subr.mxu0 0.0
    %343 = vmatpush1.msra.mxu0 %v315
    %344 = vmatprep.subr.mxu0 0.0
    %345 = vmatpush1.msra.mxu0 %v314
    %346 = vmatprep.subr.mxu0 0.0
    %347 = vmatpush1.msra.mxu0 %v313
    %348 = vmatprep.subr.mxu0 0.0
    %349 = vmatpush1.msra.mxu0 %v312
    %350 = vmatprep.subr.mxu0 0.0
    %351 = vmatpush1.msra.mxu0 %v311
    %352 = vmatprep.subr.mxu0 0.0
    %353 = vmatpush1.msra.mxu0 %v310
    %354 = vmatprep.subr.mxu0 0.0
    %355 = vmatpush1.msra.mxu0 %v309
    %356 = vmatprep.subr.mxu0 0.0
    %357 = vmatpush1.msra.mxu0 %v308
    %358 = vmatprep.subr.mxu0 0.0
    %359 = vmatpush1.msra.mxu0 %v307
    %360 = vmatprep.subr.mxu0 0.0
    %361 = vmatpush2.msra.mxu0 0.0
    %362 = vmatprep.subr.mxu0 0.0
    %363 = vmatpush2.msra.mxu0 0.0
    %364 = vmatprep.subr.mxu0 0.0
    %365 = vmatpush2.msra.mxu0 0.0
    %366 = vmatprep.subr.mxu0 0.0
    %367 = vmatpush2.msra.mxu0 0.0
    %368 = vmatprep.subr.mxu0 0.0
    %369 = vmatpush2.msra.mxu0 0.0
    %370 = vmatprep.subr.mxu0 0.0
    %371 = vmatpush2.msra.mxu0 0.0
    %372 = vmatprep.subr.mxu0 0.0
    %373 = vmatpush2.msra.mxu0 0.0
    %374 = vmatprep.subr.mxu0 0.0
    %375 = vmatpush2.msra.mxu0 0.0
    %376 = vmatprep.subr.mxu0 0.0
    %377 = vmatpush2.msra.mxu0 0.0
    %378 = vmatprep.subr.mxu0 0.0
    %379 = vmatpush2.msra.mxu0 0.0
    %380 = vmatprep.subr.mxu0 0.0
    %381 = vmatpush2.msra.mxu0 0.0
    %382 = vmatprep.subr.mxu0 0.0
    %383 = vmatpush2.msra.mxu0 0.0
    %384 = vmatprep.subr.mxu0 0.0
    %385 = vmatpush2.msra.mxu0 0.0
    %386 = vmatprep.subr.mxu0 0.0
    %387 = vmatpush2.msra.mxu0 0.0
    %388 = vmatprep.subr.mxu0 0.0
    %389 = vmatpush2.msra.mxu0 0.0
    %390 = vmatprep.subr.mxu0 0.0
    %391 = vmatpush2.msra.mxu0 0.0
    %392 = vmatprep.mubr.f32.mxu0 0.0
    %393 = vmatmul.mubr.f32.gmra.mxu0 %v305
    %v394 = vpop.f32.mrf.mxu0
    %v395 = vadd.f32 %v327, %v394
    %v396 = vpop.f32.mrf.mxu0
    %397 = vmatprep.mubr.f32.mxu0 0.0
    %398 = vmatmul.mubr.f32.gmra.mxu0 %v306
    %v399 = vpop.f32.mrf.mxu0
    %v400 = vadd.f32 %v327, %v399
    %v401 = vpop.f32.mrf.mxu0
    %402 = vdwg.mxu0
    %v403 = vmax.f32 %v395, 0.0
    %v404 = vmax.f32 %v400, 0.0
    %v405 = vld [vmem:[#allocation10] sm:$0xff]
    %v406 = vld [vmem:[#allocation10 + $0x8] sm:$0xff]
    %v407 = vld [vmem:[#allocation10 + $0x10] sm:$0xff]
    %v408 = vld [vmem:[#allocation10 + $0x18] sm:$0xff]
    %v409 = vld [vmem:[#allocation10 + $0x20] sm:$0xff]
    %v410 = vld [vmem:[#allocation10 + $0x28] sm:$0xff]
    %v411 = vld [vmem:[#allocation10 + $0x30] sm:$0xff]
    %v412 = vld [vmem:[#allocation10 + $0x38] sm:$0xff]
    %v413 = vld [vmem:[#allocation10 + $0x40] sm:$0xff]
    %v414 = vld [vmem:[#allocation10 + $0x48] sm:$0xff]
    %v415 = vld [vmem:[#allocation10 + $0x50] sm:$0xff]
    %v416 = vld [vmem:[#allocation10 + $0x58] sm:$0xff]
    %v417 = vld [vmem:[#allocation10 + $0x60] sm:$0xff]
    %v418 = vld [vmem:[#allocation10 + $0x68] sm:$0xff]
    %v419 = vld [vmem:[#allocation10 + $0x70] sm:$0xff]
    %v420 = vld [vmem:[#allocation10 + $0x78] sm:$0xff]
    %v421 = vld [vmem:[%s6 + $0x3] sm:$0x1]
    %v422 = vlaneseq
    %v423 = vshrl.u32 %v422, 7
    %v424 = vsub.s32 0, %v423
    %v425 = vrot.slane %v421, %v424
    %426 = vmatprep.subr.mxu0 0.0
    %427 = vmatpush1.msra.mxu0 %v420
    %428 = vmatprep.subr.mxu0 0.0
    %429 = vmatpush1.msra.mxu0 %v419
    %430 = vmatprep.subr.mxu0 0.0
    %431 = vmatpush1.msra.mxu0 %v418
    %432 = vmatprep.subr.mxu0 0.0
    %433 = vmatpush1.msra.mxu0 %v417
    %434 = vmatprep.subr.mxu0 0.0
    %435 = vmatpush1.msra.mxu0 %v416
    %436 = vmatprep.subr.mxu0 0.0
    %437 = vmatpush1.msra.mxu0 %v415
    %438 = vmatprep.subr.mxu0 0.0
    %439 = vmatpush1.msra.mxu0 %v414
    %440 = vmatprep.subr.mxu0 0.0
    %441 = vmatpush1.msra.mxu0 %v413
    %442 = vmatprep.subr.mxu0 0.0
    %443 = vmatpush1.msra.mxu0 %v412
    %444 = vmatprep.subr.mxu0 0.0
    %445 = vmatpush1.msra.mxu0 %v411
    %446 = vmatprep.subr.mxu0 0.0
    %447 = vmatpush1.msra.mxu0 %v410
    %448 = vmatprep.subr.mxu0 0.0
    %449 = vmatpush1.msra.mxu0 %v409
    %450 = vmatprep.subr.mxu0 0.0
    %451 = vmatpush1.msra.mxu0 %v408
    %452 = vmatprep.subr.mxu0 0.0
    %453 = vmatpush1.msra.mxu0 %v407
    %454 = vmatprep.subr.mxu0 0.0
    %455 = vmatpush1.msra.mxu0 %v406
    %456 = vmatprep.subr.mxu0 0.0
    %457 = vmatpush1.msra.mxu0 %v405
    %458 = vmatprep.subr.mxu0 0.0
    %459 = vmatpush2.msra.mxu0 0.0
    %460 = vmatprep.subr.mxu0 0.0
    %461 = vmatpush2.msra.mxu0 0.0
    %462 = vmatprep.subr.mxu0 0.0
    %463 = vmatpush2.msra.mxu0 0.0
    %464 = vmatprep.subr.mxu0 0.0
    %465 = vmatpush2.msra.mxu0 0.0
    %466 = vmatprep.subr.mxu0 0.0
    %467 = vmatpush2.msra.mxu0 0.0
    %468 = vmatprep.subr.mxu0 0.0
    %469 = vmatpush2.msra.mxu0 0.0
    %470 = vmatprep.subr.mxu0 0.0
    %471 = vmatpush2.msra.mxu0 0.0
    %472 = vmatprep.subr.mxu0 0.0
    %473 = vmatpush2.msra.mxu0 0.0
    %474 = vmatprep.subr.mxu0 0.0
    %475 = vmatpush2.msra.mxu0 0.0
    %476 = vmatprep.subr.mxu0 0.0
    %477 = vmatpush2.msra.mxu0 0.0
    %478 = vmatprep.subr.mxu0 0.0
    %479 = vmatpush2.msra.mxu0 0.0
    %480 = vmatprep.subr.mxu0 0.0
    %481 = vmatpush2.msra.mxu0 0.0
    %482 = vmatprep.subr.mxu0 0.0
    %483 = vmatpush2.msra.mxu0 0.0
    %484 = vmatprep.subr.mxu0 0.0
    %485 = vmatpush2.msra.mxu0 0.0
    %486 = vmatprep.subr.mxu0 0.0
    %487 = vmatpush2.msra.mxu0 0.0
    %488 = vmatprep.subr.mxu0 0.0
    %489 = vmatpush2.msra.mxu0 0.0
    %490 = vmatprep.mubr.f32.mxu0 0.0
    %491 = vmatmul.mubr.f32.gmra.mxu0 %v403
    %v492 = vpop.f32.mrf.mxu0
    %v493 = vadd.f32 %v425, %v492
    %v494 = vpop.f32.mrf.mxu0
    %495 = vmatprep.mubr.f32.mxu0 0.0
    %496 = vmatmul.mubr.f32.gmra.mxu0 %v404
    %v497 = vpop.f32.mrf.mxu0
    %v498 = vadd.f32 %v425, %v497
    %v499 = vpop.f32.mrf.mxu0
    %500 = vdwg.mxu0
    %v501 = vmax.f32 %v493, 0.0
    %v502 = vmax.f32 %v498, 0.0
    %v503 = vld [vmem:[#allocation11] sm:$0xff]
    %v504 = vld [vmem:[#allocation11 + $0x8] sm:$0xff]
    %v505 = vld [vmem:[#allocation11 + $0x10] sm:$0xff]
    %v506 = vld [vmem:[#allocation11 + $0x18] sm:$0xff]
    %v507 = vld [vmem:[#allocation11 + $0x20] sm:$0xff]
    %v508 = vld [vmem:[#allocation11 + $0x28] sm:$0xff]
    %v509 = vld [vmem:[#allocation11 + $0x30] sm:$0xff]
    %v510 = vld [vmem:[#allocation11 + $0x38] sm:$0xff]
    %v511 = vld [vmem:[#allocation11 + $0x40] sm:$0xff]
    %v512 = vld [vmem:[#allocation11 + $0x48] sm:$0xff]
    %v513 = vld [vmem:[#allocation11 + $0x50] sm:$0xff]
    %v514 = vld [vmem:[#allocation11 + $0x58] sm:$0xff]
    %v515 = vld [vmem:[#allocation11 + $0x60] sm:$0xff]
    %v516 = vld [vmem:[#allocation11 + $0x68] sm:$0xff]
    %v517 = vld [vmem:[#allocation11 + $0x70] sm:$0xff]
    %v518 = vld [vmem:[#allocation11 + $0x78] sm:$0xff]
    %v519 = vld [vmem:[%s6 + $0x4] sm:$0x1]
    %v520 = vlaneseq
    %v521 = vshrl.u32 %v520, 7
    %v522 = vsub.s32 0, %v521
    %v523 = vrot.slane %v519, %v522
    %524 = vmatprep.subr.mxu0 0.0
    %525 = vmatpush1.msra.mxu0 %v518
    %526 = vmatprep.subr.mxu0 0.0
    %527 = vmatpush1.msra.mxu0 %v517
    %528 = vmatprep.subr.mxu0 0.0
    %529 = vmatpush1.msra.mxu0 %v516
    %530 = vmatprep.subr.mxu0 0.0
    %531 = vmatpush1.msra.mxu0 %v515
    %532 = vmatprep.subr.mxu0 0.0
    %533 = vmatpush1.msra.mxu0 %v514
    %534 = vmatprep.subr.mxu0 0.0
    %535 = vmatpush1.msra.mxu0 %v513
    %536 = vmatprep.subr.mxu0 0.0
    %537 = vmatpush1.msra.mxu0 %v512
    %538 = vmatprep.subr.mxu0 0.0
    %539 = vmatpush1.msra.mxu0 %v511
    %540 = vmatprep.subr.mxu0 0.0
    %541 = vmatpush1.msra.mxu0 %v510
    %542 = vmatprep.subr.mxu0 0.0
    %543 = vmatpush1.msra.mxu0 %v509
    %544 = vmatprep.subr.mxu0 0.0
    %545 = vmatpush1.msra.mxu0 %v508
    %546 = vmatprep.subr.mxu0 0.0
    %547 = vmatpush1.msra.mxu0 %v507
    %548 = vmatprep.subr.mxu0 0.0
    %549 = vmatpush1.msra.mxu0 %v506
    %550 = vmatprep.subr.mxu0 0.0
    %551 = vmatpush1.msra.mxu0 %v505
    %552 = vmatprep.subr.mxu0 0.0
    %553 = vmatpush1.msra.mxu0 %v504
    %554 = vmatprep.subr.mxu0 0.0
    %555 = vmatpush1.msra.mxu0 %v503
    %556 = vmatprep.subr.mxu0 0.0
    %557 = vmatpush2.msra.mxu0 0.0
    %558 = vmatprep.subr.mxu0 0.0
    %559 = vmatpush2.msra.mxu0 0.0
    %560 = vmatprep.subr.mxu0 0.0
    %561 = vmatpush2.msra.mxu0 0.0
    %562 = vmatprep.subr.mxu0 0.0
    %563 = vmatpush2.msra.mxu0 0.0
    %564 = vmatprep.subr.mxu0 0.0
    %565 = vmatpush2.msra.mxu0 0.0
    %566 = vmatprep.subr.mxu0 0.0
    %567 = vmatpush2.msra.mxu0 0.0
    %568 = vmatprep.subr.mxu0 0.0
    %569 = vmatpush2.msra.mxu0 0.0
    %570 = vmatprep.subr.mxu0 0.0
    %571 = vmatpush2.msra.mxu0 0.0
    %572 = vmatprep.subr.mxu0 0.0
    %573 = vmatpush2.msra.mxu0 0.0
    %574 = vmatprep.subr.mxu0 0.0
    %575 = vmatpush2.msra.mxu0 0.0
    %576 = vmatprep.subr.mxu0 0.0
    %577 = vmatpush2.msra.mxu0 0.0
    %578 = vmatprep.subr.mxu0 0.0
    %579 = vmatpush2.msra.mxu0 0.0
    %580 = vmatprep.subr.mxu0 0.0
    %581 = vmatpush2.msra.mxu0 0.0
    %582 = vmatprep.subr.mxu0 0.0
    %583 = vmatpush2.msra.mxu0 0.0
    %584 = vmatprep.subr.mxu0 0.0
    %585 = vmatpush2.msra.mxu0 0.0
    %586 = vmatprep.subr.mxu0 0.0
    %587 = vmatpush2.msra.mxu0 0.0
    %588 = vmatprep.mubr.f32.mxu0 0.0
    %589 = vmatmul.mubr.f32.gmra.mxu0 %v501
    %v590 = vpop.f32.mrf.mxu0
    %v591 = vadd.f32 %v523, %v590
    %v592 = vpop.f32.mrf.mxu0
    %593 = vmatprep.mubr.f32.mxu0 0.0
    %594 = vmatmul.mubr.f32.gmra.mxu0 %v502
    %v595 = vpop.f32.mrf.mxu0
    %v596 = vadd.f32 %v523, %v595
    %v597 = vpop.f32.mrf.mxu0
    %598 = vdwg.mxu0
    %v599 = vmax.f32 %v591, 0.0
    %v600 = vmax.f32 %v596, 0.0
    %601 = vst [vmem:[#allocation13] sm:$0xff] %v599
    %602 = vst [vmem:[#allocation13 + $0x8] sm:$0xff] %v600
    // Predicated region
    $region54: #{tpu_custom_call.1} parent=1 // pred_check
      _
    $region55: #{tpu_custom_call.1} parent=1 // pred_check_branch
      %604 = sbr.rel (0) target = $region57
    $region56: #{tpu_custom_call.1} parent=1 // pred_region
      %s606 = ssub.s32 256, 256
      %607 = vsyncadd [#allocation4], %s606
      %s608 = sshll.u32 [#allocation13], 4
      %s609 = int_to_ptr.vmem [resolvable:$true] %s608
      %614 = dma.vmem_to_hbm [thread:$0]  %s609, 256, %s7, [#allocation4], 128, 128, 8
    $region57: #{tpu_custom_call.1} parent=1 // pred_fallthru
      _
    // Predicated region
    $region58: #{tpu_custom_call.1} parent=1 // pred_check
      _
    $region59: #{tpu_custom_call.1} parent=1 // pred_check_branch
      %616 = sbr.rel (0) target = $region61
    $region60: #{tpu_custom_call.1} parent=1 // pred_region
      %617 = dma.done [#allocation4], 256
    $region61: #{tpu_custom_call.1} parent=1 // pred_fallthru
      _
    %618 = vsyncpa [#allocation3], 1
    %619 = vsyncpa [#allocation6], 1
    %620 = vsyncpa [#allocation9], 1
    %621 = vsyncpa [#allocation12], 1
    %622 = vsyncpa [#allocation4], 1

</llo_original>
